<compile_context>
chip_gen: v5e
topology: v5e:2x2
jax: 0.10.0
libtpu: 0.0.40
codegen_flags: <defaults>
</compile_context>

<pallas_src>
import functools

import jax
import jax.numpy as jnp
from jax.experimental import pallas as pl
from jax.experimental.pallas import tpu as pltpu

H1, H2 = 256, 128
_BN_EPS = 1e-5          # nn.BatchNorm1d default
_SMALL_BATCH = 64       # at/below this batch, plain jnp beats the kernel launch cost


def _round_up(n, m):
    return ((n + m - 1) // m) * m


def _mlp_kernel(x_ref, w1_ref, b1_ref, w2_ref, b2_ref, w3_ref, b3_ref, o_ref):
    """Fused 3-layer MLP; eval-mode BN already folded into W2/b2 and W3/b3."""
    # Layer 1: Linear -> ReLU                 (Dropout: identity in eval)
    x = x_ref[...].astype(jnp.bfloat16)      # in-kernel cast (no wrapper copy of x)
    h = jnp.dot(x, w1_ref[...], preferred_element_type=jnp.float32)
    h = jnp.maximum(h + b1_ref[...], 0.0)

    # Layer 2: Linear -> ReLU                 (BN1 folded into W2/b2)
    h = jnp.dot(h.astype(jnp.bfloat16), w2_ref[...],
                preferred_element_type=jnp.float32)
    h = jnp.maximum(h + b2_ref[...], 0.0)

    # Layer 3: Linear -> logits               (BN2 folded into W3/b3, lane-padded)
    out = jnp.dot(h.astype(jnp.bfloat16), w3_ref[...],
                  preferred_element_type=jnp.float32)
    o_ref[...] = (out + b3_ref[...]).astype(o_ref.dtype)


def prepare_params(params):
    """One-time weight preparation (hoisted out of the forward path).

    Folds eval-mode BatchNorm forward into the following Linear, casts weights
    to bf16, lane-pads the logit dim to a multiple of 128 and reshapes biases
    to (1, F) f32 rows.  Returns (prep_dict, num_classes).
    """
    num_classes = int(params["w3"].shape[1])

    s1 = params["bn1_gamma"] / jnp.sqrt(params["bn1_var"] + _BN_EPS)
    t1 = params["bn1_beta"] - params["bn1_mean"] * s1
    s2 = params["bn2_gamma"] / jnp.sqrt(params["bn2_var"] + _BN_EPS)
    t2 = params["bn2_beta"] - params["bn2_mean"] * s2

    w2f = s1[:, None] * params["w2"]
    b2f = params["b2"] + t1 @ params["w2"]
    w3f = s2[:, None] * params["w3"]
    b3f = params["b3"] + t2 @ params["w3"]

    # Lane-dense logits: pad the class dim to a multiple of 128 (zero weights).
    np_cls = _round_up(num_classes, 128)
    w3p = jnp.zeros((H2, np_cls), jnp.float32).at[:, :num_classes].set(w3f)
    b3p = jnp.zeros((np_cls,), jnp.float32).at[:num_classes].set(b3f)

    row = lambda v: v.reshape(1, -1).astype(jnp.float32)
    prep = {
        "w1": params["w1"].astype(jnp.bfloat16),
        "b1": row(params["b1"]),
        "w2": w2f.astype(jnp.bfloat16),
        "b2": row(b2f),
        "w3": w3p.astype(jnp.bfloat16),
        "b3": row(b3p),
    }
    return jax.block_until_ready(prep), num_classes


@functools.partial(jax.jit,
                   static_argnames=("num_classes", "single_buffer_weights"))
def _forward_pallas(x, prep, *, num_classes, single_buffer_weights=True):
    batch, input_dim = x.shape
    np_cls = prep["w3"].shape[1]

    # ---- Batch tile selection: bigger tiles amortize the ~0.35 us per-step
    # pipeline overhead, but keep >= 2 tiles so v7x's two TensorCores can
    # split the "parallel" axis; cap by a VMEM budget that also fits v5e's
    # 16 MiB default scoped limit.
    io_bytes_per_row = 8 * (input_dim + np_cls)          # double-buffered f32 in+out
    io_budget = 24 << 20
    tb_cap = max(16, ((io_budget // io_bytes_per_row) // 16) * 16)
    n_tiles = max(2, pl.cdiv(batch, 1024))
    tb = max(16, min(_round_up(pl.cdiv(batch, n_tiles), 16), tb_cap))

    padded_batch = _round_up(batch, tb)
    xp = x
    if padded_batch != batch:
        xp = jnp.zeros((padded_batch, input_dim), x.dtype).at[:batch].set(x)

    # Explicit VMEM sizing: resident weights + double-buffered x/out tiles + slack.
    weight_bytes = 2 * (input_dim * H1 + H1 * H2 + H2 * np_cls) \
        + 4 * (H1 + H2 + np_cls)
    vmem_limit = int(min(48 << 20,
                         max(16 << 20,
                             weight_bytes + tb * io_bytes_per_row + (4 << 20))))

    # Weights/biases: constant block index -> DMA'd once, VMEM-resident across
    # all batch tiles; single-buffered when the installed JAX supports it.
    if single_buffer_weights:
        const = lambda shape: pl.BlockSpec(shape, lambda i: (0, 0),
                                           pipeline_mode=pl.Buffered(1))
    else:
        const = lambda shape: pl.BlockSpec(shape, lambda i: (0, 0))

    out = pl.pallas_call(
        _mlp_kernel,
        out_shape=jax.ShapeDtypeStruct((padded_batch, np_cls), jnp.float32),
        grid=(padded_batch // tb,),
        in_specs=[
            pl.BlockSpec((tb, input_dim), lambda i: (i, 0)),   # x   (streamed)
            const((input_dim, H1)),                            # W1  (resident)
            const((1, H1)),                                    # b1
            const((H1, H2)),                                   # W2  (BN1 folded)
            const((1, H2)),                                    # b2
            const((H2, np_cls)),                               # W3  (BN2 folded, padded)
            const((1, np_cls)),                                # b3
        ],
        out_specs=pl.BlockSpec((tb, np_cls), lambda i: (i, 0)),
        compiler_params=pltpu.CompilerParams(
            dimension_semantics=("parallel",),
            vmem_limit_bytes=vmem_limit),
    )(xp, prep["w1"], prep["b1"], prep["w2"], prep["b2"], prep["w3"], prep["b3"])

    # Slice only when padding exists (avoids a pointless copy otherwise).
    if padded_batch != batch or np_cls != num_classes:
        out = out[:batch, :num_classes]
    return out


@functools.partial(jax.jit, static_argnames=("num_classes",))
def _forward_jnp(x, prep, *, num_classes):
    """Small-batch fast path: same folded weights, plain XLA GEMMs (no pallas)."""
    h = jnp.maximum(
        jnp.dot(x.astype(jnp.bfloat16), prep["w1"],
                preferred_element_type=jnp.float32) + prep["b1"], 0.0)
    h = jnp.maximum(
        jnp.dot(h.astype(jnp.bfloat16), prep["w2"],
                preferred_element_type=jnp.float32) + prep["b2"], 0.0)
    out = jnp.dot(h.astype(jnp.bfloat16), prep["w3"],
                  preferred_element_type=jnp.float32) + prep["b3"]
    return out[:, :num_classes]


def simple_bird_dnn_forward(x, prep, num_classes):
    """x: (batch, input_dim) f32. (prep, num_classes) from prepare_params()."""
    if x.shape[0] <= _SMALL_BATCH:
        return _forward_jnp(x, prep, num_classes=num_classes)
    try:
        return _forward_pallas(x, prep, num_classes=num_classes,
                               single_buffer_weights=True)
    except Exception:
        # Fallback for JAX builds without BlockSpec pipeline_mode support.
        return _forward_pallas(x, prep, num_classes=num_classes,
                               single_buffer_weights=False)


def init_params(key, input_dim, num_classes):
    """Deterministic synthetic parameters matching the nn.Module shapes.

    PyTorch Linear stores weight as (out, in); we store the transpose (in, out)
    so the kernel computes x @ W directly.
    """
    h1, h2 = H1, H2
    ks = jax.random.split(key, 12)
    u = lambda k, shape, scale: jax.random.uniform(
        k, shape, jnp.float32, minval=-scale, maxval=scale)
    return {
        "w1": u(ks[0], (input_dim, h1), 1.0 / jnp.sqrt(input_dim)),
        "b1": u(ks[1], (h1,), 1.0 / jnp.sqrt(input_dim)),
        "w2": u(ks[2], (h1, h2), 1.0 / jnp.sqrt(h1)),
        "b2": u(ks[3], (h2,), 1.0 / jnp.sqrt(h1)),
        "w3": u(ks[4], (h2, num_classes), 1.0 / jnp.sqrt(h2)),
        "b3": u(ks[5], (num_classes,), 1.0 / jnp.sqrt(h2)),
        # BatchNorm1d(256) params + running stats (nontrivial, deterministic)
        "bn1_gamma": 1.0 + 0.1 * jax.random.normal(ks[6], (h1,), jnp.float32),
        "bn1_beta": 0.1 * jax.random.normal(ks[7], (h1,), jnp.float32),
        "bn1_mean": 0.05 * jax.random.normal(ks[8], (h1,), jnp.float32),
        "bn1_var": jnp.abs(1.0 + 0.1 * jax.random.normal(ks[9], (h1,), jnp.float32)),
        # BatchNorm1d(128)
        "bn2_gamma": 1.0 + 0.1 * jax.random.normal(ks[10], (h2,), jnp.float32),
        "bn2_beta": 0.1 * jax.random.normal(ks[11], (h2,), jnp.float32),
        "bn2_mean": jnp.zeros((h2,), jnp.float32),
        "bn2_var": jnp.ones((h2,), jnp.float32),
    }


def reference_forward(x, params):
    """Pure-JAX f32 reference (same eval-mode semantics, no BN folding)."""
    eps = _BN_EPS
    h = jnp.maximum(x @ params["w1"] + params["b1"], 0.0)
    h = (h - params["bn1_mean"]) / jnp.sqrt(params["bn1_var"] + eps) \
        * params["bn1_gamma"] + params["bn1_beta"]
    h = jnp.maximum(h @ params["w2"] + params["b2"], 0.0)
    h = (h - params["bn2_mean"]) / jnp.sqrt(params["bn2_var"] + eps) \
        * params["bn2_gamma"] + params["bn2_beta"]
    return h @ params["w3"] + params["b3"]


if __name__ == "__main__":
    key = jax.random.PRNGKey(0)
    k_param, k_x = jax.random.split(key)

    input_dim, num_classes = 64, 16
    params = init_params(k_param, input_dim, num_classes)
    prep, ncls = prepare_params(params)           # one-time weight prep

    # ---- Pallas path: batch above the small-batch cutoff -> the kernel runs
    # with a 2-tile grid (lets a v7x chip use both TensorCores).
    batch = 128
    x = jax.random.normal(k_x, (batch, input_dim), jnp.float32)
    out = jax.block_until_ready(simple_bird_dnn_forward(x, prep, ncls))
    ref = reference_forward(x, params)
    assert out.shape == (batch, num_classes)
    # bf16 weights/activations with f32 accumulation: inference-grade tolerance.
    assert jnp.allclose(out, ref, atol=5e-2, rtol=5e-2), "pallas mismatch vs reference"

    # ---- Small-batch fast path (no pallas_call; same folded weights).
    xs = x[:8]
    outs = jax.block_until_ready(simple_bird_dnn_forward(xs, prep, ncls))
    assert outs.shape == (8, num_classes)
    assert jnp.allclose(outs, reference_forward(xs, params),
                        atol=5e-2, rtol=5e-2), "fast-path mismatch vs reference"

    print("KERNEL_OK")
</pallas_src>

<mosaic_0001>
module attributes {stable_mosaic.version = 11 : i64} {
  func.func @_mlp_kernel(%arg0: i32, %arg1: memref<64x64xf32, #tpu.memory_space<vmem>>, %arg2: memref<64x256xbf16, #tpu.memory_space<vmem>>, %arg3: memref<1x256xf32, #tpu.memory_space<vmem>>, %arg4: memref<256x128xbf16, #tpu.memory_space<vmem>>, %arg5: memref<1x128xf32, #tpu.memory_space<vmem>>, %arg6: memref<128x128xbf16, #tpu.memory_space<vmem>>, %arg7: memref<1x128xf32, #tpu.memory_space<vmem>>, %arg8: memref<64x128xf32, #tpu.memory_space<vmem>>) attributes {dimension_semantics = [#tpu.dimension_semantics<parallel>], iteration_bounds = array<i64: 2>, scalar_prefetch = 0 : i64, scratch_operands = 0 : i64, tpu.core_type = #tpu.core_type<tc>, window_params = [{transform_indices = @transform_0, window_bounds = array<i64: 64, 64>}, {pipeline_mode = #tpu.pipeline_mode<synchronous>, transform_indices = @transform_1, window_bounds = array<i64: 64, 256>}, {pipeline_mode = #tpu.pipeline_mode<synchronous>, transform_indices = @transform_2, window_bounds = array<i64: 1, 256>}, {pipeline_mode = #tpu.pipeline_mode<synchronous>, transform_indices = @transform_3, window_bounds = array<i64: 256, 128>}, {pipeline_mode = #tpu.pipeline_mode<synchronous>, transform_indices = @transform_4, window_bounds = array<i64: 1, 128>}, {pipeline_mode = #tpu.pipeline_mode<synchronous>, transform_indices = @transform_5, window_bounds = array<i64: 128, 128>}, {pipeline_mode = #tpu.pipeline_mode<synchronous>, transform_indices = @transform_6, window_bounds = array<i64: 1, 128>}, {transform_indices = @transform_7, window_bounds = array<i64: 64, 128>}]} {
    %c0 = arith.constant 0 : index
    %c0_0 = arith.constant 0 : index
    %0 = vector.load %arg1[%c0, %c0_0] : memref<64x64xf32, #tpu.memory_space<vmem>>, vector<64x64xf32>
    %1 = arith.truncf %0 : vector<64x64xf32> to vector<64x64xbf16>
    %c0_1 = arith.constant 0 : index
    %c0_2 = arith.constant 0 : index
    %2 = vector.load %arg2[%c0_1, %c0_2] : memref<64x256xbf16, #tpu.memory_space<vmem>>, vector<64x256xbf16>
    %cst = arith.constant dense<0.000000e+00> : vector<64x256xf32>
    %3 = tpu.matmul %1, %2, %cst {dimension_numbers = #tpu.dot_dimension_numbers<[1], [0], [0], [1], [0, 0, 1, 1], [], []>} : vector<64x64xbf16>, vector<64x256xbf16>, vector<64x256xf32> -> vector<64x256xf32>
    %c0_3 = arith.constant 0 : index
    %c0_4 = arith.constant 0 : index
    %4 = vector.load %arg3[%c0_3, %c0_4] : memref<1x256xf32, #tpu.memory_space<vmem>>, vector<1x256xf32>
    %5 = vector.broadcast %4 : vector<1x256xf32> to vector<64x256xf32>
    %6 = arith.addf %3, %5 : vector<64x256xf32>
    %cst_5 = arith.constant 0.000000e+00 : f32
    %7 = vector.broadcast %cst_5 : f32 to vector<64x256xf32>
    %8 = arith.maximumf %6, %7 : vector<64x256xf32>
    %9 = arith.truncf %8 : vector<64x256xf32> to vector<64x256xbf16>
    %c0_6 = arith.constant 0 : index
    %c0_7 = arith.constant 0 : index
    %10 = vector.load %arg4[%c0_6, %c0_7] : memref<256x128xbf16, #tpu.memory_space<vmem>>, vector<256x128xbf16>
    %cst_8 = arith.constant dense<0.000000e+00> : vector<64x128xf32>
    %11 = tpu.matmul %9, %10, %cst_8 {dimension_numbers = #tpu.dot_dimension_numbers<[1], [0], [0], [1], [0, 0, 1, 1], [], []>} : vector<64x256xbf16>, vector<256x128xbf16>, vector<64x128xf32> -> vector<64x128xf32>
    %c0_9 = arith.constant 0 : index
    %c0_10 = arith.constant 0 : index
    %12 = vector.load %arg5[%c0_9, %c0_10] : memref<1x128xf32, #tpu.memory_space<vmem>>, vector<1x128xf32>
    %13 = vector.broadcast %12 : vector<1x128xf32> to vector<64x128xf32>
    %14 = arith.addf %11, %13 : vector<64x128xf32>
    %cst_11 = arith.constant 0.000000e+00 : f32
    %15 = vector.broadcast %cst_11 : f32 to vector<64x128xf32>
    %16 = arith.maximumf %14, %15 : vector<64x128xf32>
    %17 = arith.truncf %16 : vector<64x128xf32> to vector<64x128xbf16>
    %c0_12 = arith.constant 0 : index
    %c0_13 = arith.constant 0 : index
    %18 = vector.load %arg6[%c0_12, %c0_13] : memref<128x128xbf16, #tpu.memory_space<vmem>>, vector<128x128xbf16>
    %cst_14 = arith.constant dense<0.000000e+00> : vector<64x128xf32>
    %19 = tpu.matmul %17, %18, %cst_14 {dimension_numbers = #tpu.dot_dimension_numbers<[1], [0], [0], [1], [0, 0, 1, 1], [], []>} : vector<64x128xbf16>, vector<128x128xbf16>, vector<64x128xf32> -> vector<64x128xf32>
    %c0_15 = arith.constant 0 : index
    %c0_16 = arith.constant 0 : index
    %20 = vector.load %arg7[%c0_15, %c0_16] : memref<1x128xf32, #tpu.memory_space<vmem>>, vector<1x128xf32>
    %21 = vector.broadcast %20 : vector<1x128xf32> to vector<64x128xf32>
    %22 = arith.addf %19, %21 : vector<64x128xf32>
    %c0_17 = arith.constant 0 : index
    %c0_18 = arith.constant 0 : index
    %23 = vector.load %arg8[%c0_17, %c0_18] : memref<64x128xf32, #tpu.memory_space<vmem>>, vector<64x128xf32>
    tpu.vector_store %arg8[%c0_17, %c0_18], %22 {strides = array<i32>} : memref<64x128xf32, #tpu.memory_space<vmem>>, vector<64x128xf32>,
    return
  }
  func.func @transform_0(%arg0: i32) -> (i32, i32) {
    %c0_i32 = arith.constant 0 : i32
    %c0_i32_0 = arith.constant 0 : i32
    return %arg0, %c0_i32 : i32, i32
  }
  func.func @transform_1(%arg0: i32) -> (i32, i32) {
    %c0_i32 = arith.constant 0 : i32
    %c0_i32_0 = arith.constant 0 : i32
    %c0_i32_1 = arith.constant 0 : i32
    return %c0_i32, %c0_i32_0 : i32, i32
  }
  func.func @transform_2(%arg0: i32) -> (i32, i32) {
    %c0_i32 = arith.constant 0 : i32
    %c0_i32_0 = arith.constant 0 : i32
    %c0_i32_1 = arith.constant 0 : i32
    return %c0_i32, %c0_i32_0 : i32, i32
  }
  func.func @transform_3(%arg0: i32) -> (i32, i32) {
    %c0_i32 = arith.constant 0 : i32
    %c0_i32_0 = arith.constant 0 : i32
    %c0_i32_1 = arith.constant 0 : i32
    return %c0_i32, %c0_i32_0 : i32, i32
  }
  func.func @transform_4(%arg0: i32) -> (i32, i32) {
    %c0_i32 = arith.constant 0 : i32
    %c0_i32_0 = arith.constant 0 : i32
    %c0_i32_1 = arith.constant 0 : i32
    return %c0_i32, %c0_i32_0 : i32, i32
  }
  func.func @transform_5(%arg0: i32) -> (i32, i32) {
    %c0_i32 = arith.constant 0 : i32
    %c0_i32_0 = arith.constant 0 : i32
    %c0_i32_1 = arith.constant 0 : i32
    return %c0_i32, %c0_i32_0 : i32, i32
  }
  func.func @transform_6(%arg0: i32) -> (i32, i32) {
    %c0_i32 = arith.constant 0 : i32
    %c0_i32_0 = arith.constant 0 : i32
    %c0_i32_1 = arith.constant 0 : i32
    return %c0_i32, %c0_i32_0 : i32, i32
  }
  func.func @transform_7(%arg0: i32) -> (i32, i32) {
    %c0_i32 = arith.constant 0 : i32
    %c0_i32_0 = arith.constant 0 : i32
    return %arg0, %c0_i32 : i32, i32
  }
}

module attributes {stable_mosaic.version = 11 : i64} {
  func.func @_mlp_kernel(%arg0: i32, %arg1: memref<64x64xf32, #tpu.memory_space<vmem>>, %arg2: memref<64x256xbf16, #tpu.memory_space<vmem>>, %arg3: memref<1x256xf32, #tpu.memory_space<vmem>>, %arg4: memref<256x128xbf16, #tpu.memory_space<vmem>>, %arg5: memref<1x128xf32, #tpu.memory_space<vmem>>, %arg6: memref<128x128xbf16, #tpu.memory_space<vmem>>, %arg7: memref<1x128xf32, #tpu.memory_space<vmem>>, %arg8: memref<64x128xf32, #tpu.memory_space<vmem>>) attributes {dimension_semantics = [#tpu.dimension_semantics<parallel>], iteration_bounds = array<i64: 2>, scalar_prefetch = 0 : i64, scratch_operands = 0 : i64, tpu.core_type = #tpu.core_type<tc>, window_params = [{transform_indices = @transform_0, window_bounds = array<i64: 64, 64>}, {pipeline_mode = #tpu.pipeline_mode<synchronous>, transform_indices = @transform_1, window_bounds = array<i64: 64, 256>}, {pipeline_mode = #tpu.pipeline_mode<synchronous>, transform_indices = @transform_2, window_bounds = array<i64: 1, 256>}, {pipeline_mode = #tpu.pipeline_mode<synchronous>, transform_indices = @transform_3, window_bounds = array<i64: 256, 128>}, {pipeline_mode = #tpu.pipeline_mode<synchronous>, transform_indices = @transform_4, window_bounds = array<i64: 1, 128>}, {pipeline_mode = #tpu.pipeline_mode<synchronous>, transform_indices = @transform_5, window_bounds = array<i64: 128, 128>}, {pipeline_mode = #tpu.pipeline_mode<synchronous>, transform_indices = @transform_6, window_bounds = array<i64: 1, 128>}, {transform_indices = @transform_7, window_bounds = array<i64: 64, 128>}]} {
    %c0 = arith.constant 0 : index
    %c0_0 = arith.constant 0 : index
    %0 = vector.load %arg1[%c0, %c0_0] : memref<64x64xf32, #tpu.memory_space<vmem>>, vector<64x64xf32>
    %1 = arith.truncf %0 : vector<64x64xf32> to vector<64x64xbf16>
    %c0_1 = arith.constant 0 : index
    %c0_2 = arith.constant 0 : index
    %2 = vector.load %arg2[%c0_1, %c0_2] : memref<64x256xbf16, #tpu.memory_space<vmem>>, vector<64x256xbf16>
    %cst = arith.constant dense<0.000000e+00> : vector<64x256xf32>
    %3 = tpu.matmul %1, %2, %cst {dimension_numbers = #tpu.dot_dimension_numbers<[1], [0], [0], [1], [0, 0, 1, 1], [], []>} : vector<64x64xbf16>, vector<64x256xbf16>, vector<64x256xf32> -> vector<64x256xf32>
    %c0_3 = arith.constant 0 : index
    %c0_4 = arith.constant 0 : index
    %4 = vector.load %arg3[%c0_3, %c0_4] : memref<1x256xf32, #tpu.memory_space<vmem>>, vector<1x256xf32>
    %5 = vector.broadcast %4 : vector<1x256xf32> to vector<64x256xf32>
    %6 = arith.addf %3, %5 : vector<64x256xf32>
    %cst_5 = arith.constant 0.000000e+00 : f32
    %7 = vector.broadcast %cst_5 : f32 to vector<64x256xf32>
    %8 = arith.maximumf %6, %7 : vector<64x256xf32>
    %9 = arith.truncf %8 : vector<64x256xf32> to vector<64x256xbf16>
    %c0_6 = arith.constant 0 : index
    %c0_7 = arith.constant 0 : index
    %10 = vector.load %arg4[%c0_6, %c0_7] : memref<256x128xbf16, #tpu.memory_space<vmem>>, vector<256x128xbf16>
    %cst_8 = arith.constant dense<0.000000e+00> : vector<64x128xf32>
    %11 = tpu.matmul %9, %10, %cst_8 {dimension_numbers = #tpu.dot_dimension_numbers<[1], [0], [0], [1], [0, 0, 1, 1], [], []>} : vector<64x256xbf16>, vector<256x128xbf16>, vector<64x128xf32> -> vector<64x128xf32>
    %c0_9 = arith.constant 0 : index
    %c0_10 = arith.constant 0 : index
    %12 = vector.load %arg5[%c0_9, %c0_10] : memref<1x128xf32, #tpu.memory_space<vmem>>, vector<1x128xf32>
    %13 = vector.broadcast %12 : vector<1x128xf32> to vector<64x128xf32>
    %14 = arith.addf %11, %13 : vector<64x128xf32>
    %cst_11 = arith.constant 0.000000e+00 : f32
    %15 = vector.broadcast %cst_11 : f32 to vector<64x128xf32>
    %16 = arith.maximumf %14, %15 : vector<64x128xf32>
    %17 = arith.truncf %16 : vector<64x128xf32> to vector<64x128xbf16>
    %c0_12 = arith.constant 0 : index
    %c0_13 = arith.constant 0 : index
    %18 = vector.load %arg6[%c0_12, %c0_13] : memref<128x128xbf16, #tpu.memory_space<vmem>>, vector<128x128xbf16>
    %cst_14 = arith.constant dense<0.000000e+00> : vector<64x128xf32>
    %19 = tpu.matmul %17, %18, %cst_14 {dimension_numbers = #tpu.dot_dimension_numbers<[1], [0], [0], [1], [0, 0, 1, 1], [], []>} : vector<64x128xbf16>, vector<128x128xbf16>, vector<64x128xf32> -> vector<64x128xf32>
    %c0_15 = arith.constant 0 : index
    %c0_16 = arith.constant 0 : index
    %20 = vector.load %arg7[%c0_15, %c0_16] : memref<1x128xf32, #tpu.memory_space<vmem>>, vector<1x128xf32>
    %21 = vector.broadcast %20 : vector<1x128xf32> to vector<64x128xf32>
    %22 = arith.addf %19, %21 : vector<64x128xf32>
    %c0_17 = arith.constant 0 : index
    %c0_18 = arith.constant 0 : index
    %23 = vector.load %arg8[%c0_17, %c0_18] : memref<64x128xf32, #tpu.memory_space<vmem>>, vector<64x128xf32>
    tpu.vector_store %arg8[%c0_17, %c0_18], %22 {strides = array<i32>} : memref<64x128xf32, #tpu.memory_space<vmem>>, vector<64x128xf32>,
    return
  }
  func.func @transform_0(%arg0: i32) -> (i32, i32) {
    %c0_i32 = arith.constant 0 : i32
    %c0_i32_0 = arith.constant 0 : i32
    return %arg0, %c0_i32 : i32, i32
  }
  func.func @transform_1(%arg0: i32) -> (i32, i32) {
    %c0_i32 = arith.constant 0 : i32
    %c0_i32_0 = arith.constant 0 : i32
    %c0_i32_1 = arith.constant 0 : i32
    return %c0_i32, %c0_i32_0 : i32, i32
  }
  func.func @transform_2(%arg0: i32) -> (i32, i32) {
    %c0_i32 = arith.constant 0 : i32
    %c0_i32_0 = arith.constant 0 : i32
    %c0_i32_1 = arith.constant 0 : i32
    return %c0_i32, %c0_i32_0 : i32, i32
  }
  func.func @transform_3(%arg0: i32) -> (i32, i32) {
    %c0_i32 = arith.constant 0 : i32
    %c0_i32_0 = arith.constant 0 : i32
    %c0_i32_1 = arith.constant 0 : i32
    return %c0_i32, %c0_i32_0 : i32, i32
  }
  func.func @transform_4(%arg0: i32) -> (i32, i32) {
    %c0_i32 = arith.constant 0 : i32
    %c0_i32_0 = arith.constant 0 : i32
    %c0_i32_1 = arith.constant 0 : i32
    return %c0_i32, %c0_i32_0 : i32, i32
  }
  func.func @transform_5(%arg0: i32) -> (i32, i32) {
    %c0_i32 = arith.constant 0 : i32
    %c0_i32_0 = arith.constant 0 : i32
    %c0_i32_1 = arith.constant 0 : i32
    return %c0_i32, %c0_i32_0 : i32, i32
  }
  func.func @transform_6(%arg0: i32) -> (i32, i32) {
    %c0_i32 = arith.constant 0 : i32
    %c0_i32_0 = arith.constant 0 : i32
    %c0_i32_1 = arith.constant 0 : i32
    return %c0_i32, %c0_i32_0 : i32, i32
  }
  func.func @transform_7(%arg0: i32) -> (i32, i32) {
    %c0_i32 = arith.constant 0 : i32
    %c0_i32_0 = arith.constant 0 : i32
    return %arg0, %c0_i32 : i32, i32
  }
}

</mosaic_0001>

<llo_original>
// kernel: _forward_pallas.1
$region0: #{_forward_pallas.1}
  #allocation0 [shape = 'u32[]', space=smem, size = 0x4, offset = 0x4, fixed_abs, tag = 'smem constant byte address 0x4 - core index']
  #allocation1 [shape = 'u32[72,128]{1,0:T(1,128)}', space=vmem, size = 0x9000, scoped, tag = 'internal scratch']
  %s0 = inlined_call_operand.vmem [shape: f32[128,64], index: 0, kind: input, shape index: {}]
  %s1 = inlined_call_operand.vmem [shape: bf16[64,256], index: 1, kind: input, shape index: {}]
  %s2 = inlined_call_operand.vmem [shape: f32[1,256], index: 2, kind: input, shape index: {}]
  %s3 = inlined_call_operand.vmem [shape: bf16[256,128], index: 3, kind: input, shape index: {}]
  %s4 = inlined_call_operand.vmem [shape: f32[1,128], index: 4, kind: input, shape index: {}]
  %s5 = inlined_call_operand.hbm [shape: bf16[128,128], index: 5, kind: input, shape index: {}]
  %s6 = inlined_call_operand.vmem [shape: f32[1,128], index: 6, kind: input, shape index: {}]
  %s7 = inlined_call_operand.vmem [shape: f32[128,128], index: 7, kind: output, shape index: {}]
  %s8 = sld [smem:[#allocation0]]
  $region65: #{_forward_pallas.1} parent=0
    _
  %s10 = ssub.s32 1, %s8
  %s11 = scalar_select 0, %s10, %s8
  $region1: #{_forward_pallas.1} parent=0
    #allocation2 [shape = 'u8[32768]{0}', space=vmem, size = 0x8000, scoped, tag = 'input window, operand 5, single buffered']
    #allocation3 [shape = 's32[2]{0}', space=sflag, size = 0x8, scoped, tag = 'scoped memory for _forward_pallas.1']
    %12 = vsyncpa [#allocation3], 0
    loop: start=0, step=1, limit=4
    $region2: #{_forward_pallas.1} parent=1 // loop_pre_header
      _
    $region3: #{_forward_pallas.1} parent=1 // loop_header
      %s14 = sphi 0, %s18
      %p15 = scmp.ge.s32.totalorder %s14, 4
      %s24 = sphi 0, %s26
      %s27 = sphi 0, %s24
      %s28 = sphi 0, %s27
      %s44 = sphi 0, %s28
      %s48 = sphi 0, %s48
      %s50 = sphi 0, %s48
      %s51 = sphi 0, %s50
      %s65 = sphi 0, %s51
      %s69 = sphi 0, %s69
      %s71 = sphi 0, %s69
      %s72 = sphi 0, %s71
      %s86 = sphi 0, %s72
      %s90 = sphi 0, %s90
      %s92 = sphi 0, %s90
      %s93 = sphi 0, %s92
      %s107 = sphi 0, %s93
      %s111 = sphi 0, %s111
      %s113 = sphi 0, %s111
      %s114 = sphi 0, %s113
      %s128 = sphi 0, %s114
      %s132 = sphi 0, %s132
      %s134 = sphi 0, %s132
      %s135 = sphi 0, %s134
      %s149 = sphi 0, %s135
      %s153 = sphi 0, %s153
      %s155 = sphi 0, %s153
      %s156 = sphi 0, %s155
      %s170 = sphi 0, %s156
      %s176 = sphi 0, %s178
      %s179 = sphi 0, %s176
      %s180 = sphi 0, %s179
      %s196 = sphi 0, %s180
    $region4: #{_forward_pallas.1} parent=1 // loop_header_branch
      %17 = sbr.rel (%p15) target = $region8
    $region5: #{_forward_pallas.1} parent=1 // loop_body
      %s19 = ssub.s32 %s14, 1
      %s20 = ssub.s32 %s14, 2
      %s21 = sadd.s32 %s14, 1
      %s22 = ssub.s32 %s14, %s21
      %p23 = scmp.eq.s32.totalorder %s22, 0
      %s25 = sadd.s32 %s24, 1
      %s26 = scalar_select %p23, %s24, %s25
      %p29 = pneg %p23
      %p30 = scmp.eq.s32.totalorder %s14, 1
      %p31 = por %p29, %p30
      %p32 = scmp.ne.s32.totalorder %s24, %s27
      %p33 = scmp.eq.s32.totalorder %s14, 0
      %p34 = por %p32, %p33
      %p35 = scmp.ne.s32.totalorder %s24, %s27
      %p36 = scmp.eq.s32.totalorder %s19, 1
      %p37 = por %p35, %p36
      %p38 = scmp.ne.s32.totalorder %s27, %s28
      %p39 = scmp.eq.s32.totalorder %s19, 0
      %p40 = por %p38, %p39
      %p41 = scmp.ne.s32.totalorder %s27, %s28
      %p42 = scmp.eq.s32.totalorder %s20, 1
      %p43 = por %p41, %p42
      %p45 = scmp.ne.s32.totalorder %s28, %s44
      %p46 = scmp.eq.s32.totalorder %s20, 0
      %p47 = por %p45, %p46
      %s49 = sadd.s32 %s48, 1
      %p52 = scmp.eq.s32.totalorder %s14, 1
      %p53 = scmp.ne.s32.totalorder %s48, %s50
      %p54 = scmp.eq.s32.totalorder %s14, 0
      %p55 = por %p53, %p54
      %p56 = scmp.ne.s32.totalorder %s48, %s50
      %p57 = scmp.eq.s32.totalorder %s19, 1
      %p58 = por %p56, %p57
      %p59 = scmp.ne.s32.totalorder %s50, %s51
      %p60 = scmp.eq.s32.totalorder %s19, 0
      %p61 = por %p59, %p60
      %p62 = scmp.ne.s32.totalorder %s50, %s51
      %p63 = scmp.eq.s32.totalorder %s20, 1
      %p64 = por %p62, %p63
      %p66 = scmp.ne.s32.totalorder %s51, %s65
      %p67 = scmp.eq.s32.totalorder %s20, 0
      %p68 = por %p66, %p67
      %s70 = sadd.s32 %s69, 1
      %p73 = scmp.eq.s32.totalorder %s14, 1
      %p74 = scmp.ne.s32.totalorder %s69, %s71
      %p75 = scmp.eq.s32.totalorder %s14, 0
      %p76 = por %p74, %p75
      %p77 = scmp.ne.s32.totalorder %s69, %s71
      %p78 = scmp.eq.s32.totalorder %s19, 1
      %p79 = por %p77, %p78
      %p80 = scmp.ne.s32.totalorder %s71, %s72
      %p81 = scmp.eq.s32.totalorder %s19, 0
      %p82 = por %p80, %p81
      %p83 = scmp.ne.s32.totalorder %s71, %s72
      %p84 = scmp.eq.s32.totalorder %s20, 1
      %p85 = por %p83, %p84
      %p87 = scmp.ne.s32.totalorder %s72, %s86
      %p88 = scmp.eq.s32.totalorder %s20, 0
      %p89 = por %p87, %p88
      %s91 = sadd.s32 %s90, 1
      %p94 = scmp.eq.s32.totalorder %s14, 1
      %p95 = scmp.ne.s32.totalorder %s90, %s92
      %p96 = scmp.eq.s32.totalorder %s14, 0
      %p97 = por %p95, %p96
      %p98 = scmp.ne.s32.totalorder %s90, %s92
      %p99 = scmp.eq.s32.totalorder %s19, 1
      %p100 = por %p98, %p99
      %p101 = scmp.ne.s32.totalorder %s92, %s93
      %p102 = scmp.eq.s32.totalorder %s19, 0
      %p103 = por %p101, %p102
      %p104 = scmp.ne.s32.totalorder %s92, %s93
      %p105 = scmp.eq.s32.totalorder %s20, 1
      %p106 = por %p104, %p105
      %p108 = scmp.ne.s32.totalorder %s93, %s107
      %p109 = scmp.eq.s32.totalorder %s20, 0
      %p110 = por %p108, %p109
      %s112 = sadd.s32 %s111, 1
      %p115 = scmp.eq.s32.totalorder %s14, 1
      %p116 = scmp.ne.s32.totalorder %s111, %s113
      %p117 = scmp.eq.s32.totalorder %s14, 0
      %p118 = por %p116, %p117
      %p119 = scmp.ne.s32.totalorder %s111, %s113
      %p120 = scmp.eq.s32.totalorder %s19, 1
      %p121 = por %p119, %p120
      %p122 = scmp.ne.s32.totalorder %s113, %s114
      %p123 = scmp.eq.s32.totalorder %s19, 0
      %p124 = por %p122, %p123
      %p125 = scmp.ne.s32.totalorder %s113, %s114
      %p126 = scmp.eq.s32.totalorder %s20, 1
      %p127 = por %p125, %p126
      %p129 = scmp.ne.s32.totalorder %s114, %s128
      %p130 = scmp.eq.s32.totalorder %s20, 0
      %p131 = por %p129, %p130
      %s133 = sadd.s32 %s132, 1
      %p136 = scmp.eq.s32.totalorder %s14, 1
      %p137 = scmp.ne.s32.totalorder %s132, %s134
      %p138 = scmp.eq.s32.totalorder %s14, 0
      %p139 = por %p137, %p138
      %p140 = scmp.ne.s32.totalorder %s132, %s134
      %p141 = scmp.eq.s32.totalorder %s19, 1
      %p142 = por %p140, %p141
      %p143 = scmp.ne.s32.totalorder %s134, %s135
      %p144 = scmp.eq.s32.totalorder %s19, 0
      %p145 = por %p143, %p144
      %p146 = scmp.ne.s32.totalorder %s134, %s135
      %p147 = scmp.eq.s32.totalorder %s20, 1
      %p148 = por %p146, %p147
      %p150 = scmp.ne.s32.totalorder %s135, %s149
      %p151 = scmp.eq.s32.totalorder %s20, 0
      %p152 = por %p150, %p151
      %s154 = sadd.s32 %s153, 1
      %p157 = scmp.eq.s32.totalorder %s14, 1
      %p158 = scmp.ne.s32.totalorder %s153, %s155
      %p159 = scmp.eq.s32.totalorder %s14, 0
      %p160 = por %p158, %p159
      %p161 = scmp.ne.s32.totalorder %s153, %s155
      %p162 = scmp.eq.s32.totalorder %s19, 1
      %p163 = por %p161, %p162
      %p164 = scmp.ne.s32.totalorder %s155, %s156
      %p165 = scmp.eq.s32.totalorder %s19, 0
      %p166 = por %p164, %p165
      %p167 = scmp.ne.s32.totalorder %s155, %s156
      %p168 = scmp.eq.s32.totalorder %s20, 1
      %p169 = por %p167, %p168
      %p171 = scmp.ne.s32.totalorder %s156, %s170
      %p172 = scmp.eq.s32.totalorder %s20, 0
      %p173 = por %p171, %p172
      %s174 = ssub.s32 %s14, %s21
      %p175 = scmp.eq.s32.totalorder %s174, 0
      %s177 = sadd.s32 %s176, 1
      %s178 = scalar_select %p175, %s176, %s177
      %p181 = pneg %p175
      %p182 = scmp.eq.s32.totalorder %s14, 1
      %p183 = por %p181, %p182
      %p184 = scmp.ne.s32.totalorder %s176, %s179
      %p185 = scmp.eq.s32.totalorder %s14, 0
      %p186 = por %p184, %p185
      %p187 = scmp.ne.s32.totalorder %s176, %s179
      %p188 = scmp.eq.s32.totalorder %s19, 1
      %p189 = por %p187, %p188
      %p190 = scmp.ne.s32.totalorder %s179, %s180
      %p191 = scmp.eq.s32.totalorder %s19, 0
      %p192 = por %p190, %p191
      %p193 = scmp.ne.s32.totalorder %s179, %s180
      %p194 = scmp.eq.s32.totalorder %s20, 1
      %p195 = por %p193, %p194
      %p197 = scmp.ne.s32.totalorder %s180, %s196
      %p198 = scmp.eq.s32.totalorder %s20, 0
      %p199 = por %p197, %p198
      %p200 = scmp.le.s32.totalorder 1, %s14
      %p201 = scmp.lt.s32.totalorder %s14, 3
      %p202 = pnand %p200, %p201
      %p203 = pneg %p202
      // Predicated region
      $region9: #{_forward_pallas.1} parent=5 // pred_check
        _
      $region10: #{_forward_pallas.1} parent=5 // pred_check_branch
        %205 = sbr.rel (%p202) target = $region12
      $region11: #{_forward_pallas.1} parent=5 // pred_region
        %s206 = ssub.s32 %s14, 1
        // Predicated region
        $region13: #{_forward_pallas.1} parent=11 // pred_check
          %p207 = pneg %p61
        $region14: #{_forward_pallas.1} parent=11 // pred_check_branch
          %209 = sbr.rel (%p207) target = $region16
        $region15: #{_forward_pallas.1} parent=11 // pred_region
          _
        $region16: #{_forward_pallas.1} parent=11 // pred_fallthru
          _
        // Predicated region
        $region17: #{_forward_pallas.1} parent=11 // pred_check
          %p210 = pneg %p82
        $region18: #{_forward_pallas.1} parent=11 // pred_check_branch
          %212 = sbr.rel (%p210) target = $region20
        $region19: #{_forward_pallas.1} parent=11 // pred_region
          _
        $region20: #{_forward_pallas.1} parent=11 // pred_fallthru
          _
        // Predicated region
        $region21: #{_forward_pallas.1} parent=11 // pred_check
          %p213 = pneg %p103
        $region22: #{_forward_pallas.1} parent=11 // pred_check_branch
          %215 = sbr.rel (%p213) target = $region24
        $region23: #{_forward_pallas.1} parent=11 // pred_region
          _
        $region24: #{_forward_pallas.1} parent=11 // pred_fallthru
          _
        // Predicated region
        $region25: #{_forward_pallas.1} parent=11 // pred_check
          %p216 = pneg %p124
        $region26: #{_forward_pallas.1} parent=11 // pred_check_branch
          %218 = sbr.rel (%p216) target = $region28
        $region27: #{_forward_pallas.1} parent=11 // pred_region
          _
        $region28: #{_forward_pallas.1} parent=11 // pred_fallthru
          _
        // Predicated region
        $region29: #{_forward_pallas.1} parent=11 // pred_check
          %p219 = pneg %p145
        $region30: #{_forward_pallas.1} parent=11 // pred_check_branch
          %221 = sbr.rel (%p219) target = $region32
        $region31: #{_forward_pallas.1} parent=11 // pred_region
          %223 = vsyncadd [#allocation3], 0
          %s224 = sshll.u32 %s5, 4
          %s225 = int_to_ptr.hbm [resolvable:$true] %s224
          %s226 = sshll.u32 [#allocation2], 4
          %s227 = int_to_ptr.vmem [resolvable:$true] %s226
          %232 = dma.hbm_to_vmem [thread:$0]  %s225, 1024, %s227, [#allocation3], 64, 64, 4
        $region32: #{_forward_pallas.1} parent=11 // pred_fallthru
          _
        // Predicated region
        $region33: #{_forward_pallas.1} parent=11 // pred_check
          %p233 = pneg %p166
        $region34: #{_forward_pallas.1} parent=11 // pred_check_branch
          %235 = sbr.rel (%p233) target = $region36
        $region35: #{_forward_pallas.1} parent=11 // pred_region
          _
        $region36: #{_forward_pallas.1} parent=11 // pred_fallthru
          _
      $region12: #{_forward_pallas.1} parent=5 // pred_fallthru
        _
      %p236 = scmp.lt.s32.totalorder %s14, 2
      // Predicated region
      $region37: #{_forward_pallas.1} parent=5 // pred_check
        %p237 = pneg %p236
      $region38: #{_forward_pallas.1} parent=5 // pred_check_branch
        %239 = sbr.rel (%p237) target = $region40
      $region39: #{_forward_pallas.1} parent=5 // pred_region
        // Predicated region
        $region41: #{_forward_pallas.1} parent=39 // pred_check
          %p240 = pneg %p34
        $region42: #{_forward_pallas.1} parent=39 // pred_check_branch
          %242 = sbr.rel (%p240) target = $region44
        $region43: #{_forward_pallas.1} parent=39 // pred_region
          %s243 = smul.u32 8, %s14
          %p244 = scmp.lt.s32.totalorder %s243, 15
          %s245 = scalar_select %p244, %s243, 15
          %s246 = smul.addr %s245, 8
          %s247 = scalar_lea.vmem %s0, %s246
          %s248 = smul.u32 8, %s14
        $region44: #{_forward_pallas.1} parent=39 // pred_fallthru
          _
      $region40: #{_forward_pallas.1} parent=5 // pred_fallthru
        _
      %p249 = scmp.le.s32.totalorder 1, %s14
      %p250 = scmp.lt.s32.totalorder %s14, 3
      %p251 = pnand %p249, %p250
      %p252 = pneg %p251
      // Predicated region
      $region45: #{_forward_pallas.1} parent=5 // pred_check
        _
      $region46: #{_forward_pallas.1} parent=5 // pred_check_branch
        %254 = sbr.rel (%p251) target = $region48
      $region47: #{_forward_pallas.1} parent=5 // pred_region
        %s255 = ssub.s32 %s14, 1
        // Predicated region
        $region49: #{_forward_pallas.1} parent=47 // pred_check
          %p256 = pneg %p145
        $region50: #{_forward_pallas.1} parent=47 // pred_check_branch
          %258 = sbr.rel (%p256) target = $region52
        $region51: #{_forward_pallas.1} parent=47 // pred_region
          %260 = dma.done [#allocation3], 1024
        $region52: #{_forward_pallas.1} parent=47 // pred_fallthru
          _
        %s261 = smul.u32 8, %s19
        %p262 = scmp.lt.s32.totalorder %s261, 15
        %s263 = scalar_select %p262, %s261, 15
        %s264 = smul.addr %s263, 8
        %s265 = scalar_lea.vmem %s0, %s264
        %p266 = pneg %p40
        %p267 = pneg %p37
        %p268 = pneg %p61
        %p269 = pneg %p58
        %p270 = pneg %p82
        %p271 = pneg %p79
        %p272 = pneg %p103
        %p273 = pneg %p100
        %p274 = pneg %p124
        %p275 = pneg %p121
        %p276 = pneg %p145
        %p277 = pneg %p142
        %p278 = pneg %p166
        %p279 = pneg %p163
        %p280 = pneg %p192
        %p281 = pneg %p189
        %s282 = smul.u32 8, %s19
        %p283 = scmp.lt.s32.totalorder %s282, 15
        %s284 = scalar_select %p283, %s282, 15
        %s285 = smul.addr %s284, 8
        %s286 = scalar_lea.vmem %s7, %s285
        %s287 = smul.u32 8, %s19
        %p288 = scmp.lt.s32.totalorder %s287, 15
        %s289 = scalar_select %p288, %s287, 15
        %s290 = smul.addr %s289, 8
        %s291 = scalar_lea.vmem %s0, %s290
        %s292 = smul.u32 8, %s19
        %s293 = smul.u32 8, %s19
        %p294 = scmp.lt.s32.totalorder %s293, 15
        %s295 = scalar_select %p294, %s293, 15
        %s296 = smul.addr %s295, 8
        %s297 = scalar_lea.vmem %s7, %s296
        %s298 = smul.u32 8, %s19
        %v300 = vld [vmem:[%s291] sm:$0xff]
        %v301 = vld [vmem:[%s291 + $0x8] sm:$0xff]
        %v302 = vld [vmem:[%s291 + $0x10] sm:$0xff]
        %v303 = vld [vmem:[%s291 + $0x18] sm:$0xff]
        %v304 = vld [vmem:[%s291 + $0x20] sm:$0xff]
        %v305 = vld [vmem:[%s291 + $0x28] sm:$0xff]
        %v306 = vld [vmem:[%s291 + $0x30] sm:$0xff]
        %v307 = vld [vmem:[%s291 + $0x38] sm:$0xff]
        %v308 = vpack.c.bf16 %v301, %v300
        %v309 = vpack.c.bf16 %v303, %v302
        %v310 = vpack.c.bf16 %v305, %v304
        %v311 = vpack.c.bf16 %v307, %v306
        %v312 = vld [vmem:[%s1] sm:$0xff]
        %v313 = vld [vmem:[%s1 + $0x8] sm:$0xff]
        %v314 = vld [vmem:[%s1 + $0x10] sm:$0xff]
        %v315 = vld [vmem:[%s1 + $0x18] sm:$0xff]
        %v316 = vld [vmem:[%s1 + $0x20] sm:$0xff]
        %v317 = vld [vmem:[%s1 + $0x28] sm:$0xff]
        %v318 = vld [vmem:[%s1 + $0x30] sm:$0xff]
        %v319 = vld [vmem:[%s1 + $0x38] sm:$0xff]
        %v320 = vld [vmem:[%s2] sm:$0x3]
        %v322 = vperm.slane %v320, 0
        %v323 = vperm.slane %v320, 1
        %v334 = vunpack.c.l.b16 %v312
        %v335 = vunpack.c.h.b16 %v312
        %v336 = vunpack.c.l.b16 %v313
        %v337 = vunpack.c.h.b16 %v313
        %v338 = vunpack.c.l.b16 %v314
        %v339 = vunpack.c.h.b16 %v314
        %v340 = vunpack.c.l.b16 %v315
        %v341 = vunpack.c.h.b16 %v315
        %v342 = vunpack.c.l.b16 %v316
        %v343 = vunpack.c.h.b16 %v316
        %v344 = vunpack.c.l.b16 %v317
        %v345 = vunpack.c.h.b16 %v317
        %v346 = vunpack.c.l.b16 %v318
        %v347 = vunpack.c.h.b16 %v318
        %v348 = vunpack.c.l.b16 %v319
        %v349 = vunpack.c.h.b16 %v319
        %v350 = vpack.c.b16 %v336, %v334
        %v351 = vpack.c.b16 %v337, %v335
        %v352 = vpack.c.b16 %v340, %v338
        %v353 = vpack.c.b16 %v341, %v339
        %v354 = vpack.c.b16 %v344, %v342
        %v355 = vpack.c.b16 %v345, %v343
        %v356 = vpack.c.b16 %v348, %v346
        %v357 = vpack.c.b16 %v349, %v347
        %vm366 = vcmask 523264
        %v368 = vsel %vm366, %v308, 0
        %v371 = vsel %vm366, %v309, 0
        %v374 = vsel %vm366, %v310, 0
        %v377 = vsel %vm366, %v311, 0
        %379 = vmatpush.bf16.msra.mxu0 0
        %380 = vmatpush.bf16.msra.mxu0 0
        %381 = vmatpush.bf16.msra.mxu0 0
        %382 = vmatpush.bf16.msra.mxu0 0
        %383 = vmatpush.bf16.msra.mxu0 %v356
        %384 = vmatpush.bf16.msra.mxu0 %v354
        %385 = vmatpush.bf16.msra.mxu0 %v352
        %386 = vmatpush.bf16.msra.mxu0 %v350
        %387 = vmatmul.bf16.gmra.mxu0 %v368
        %v388 = vpop.f32.mrf.mxu0
        %v389 = vadd.f32 %v322, %v388
        %v390 = vpop.f32.mrf.mxu0
        %v391 = vadd.f32 %v322, %v390
        %392 = vmatmul.bf16.gmra.mxu0 %v371
        %v393 = vpop.f32.mrf.mxu0
        %v394 = vadd.f32 %v322, %v393
        %v395 = vpop.f32.mrf.mxu0
        %v396 = vadd.f32 %v322, %v395
        %397 = vmatmul.bf16.gmra.mxu0 %v374
        %v398 = vpop.f32.mrf.mxu0
        %v399 = vadd.f32 %v322, %v398
        %v400 = vpop.f32.mrf.mxu0
        %v401 = vadd.f32 %v322, %v400
        %402 = vmatmul.bf16.gmra.mxu0 %v377
        %v403 = vpop.f32.mrf.mxu0
        %v404 = vadd.f32 %v322, %v403
        %v405 = vpop.f32.mrf.mxu0
        %v406 = vadd.f32 %v322, %v405
        %407 = vdwg.mxu0
        %408 = vmatpush.bf16.msra.mxu0 0
        %409 = vmatpush.bf16.msra.mxu0 0
        %410 = vmatpush.bf16.msra.mxu0 0
        %411 = vmatpush.bf16.msra.mxu0 0
        %412 = vmatpush.bf16.msra.mxu0 %v357
        %413 = vmatpush.bf16.msra.mxu0 %v355
        %414 = vmatpush.bf16.msra.mxu0 %v353
        %415 = vmatpush.bf16.msra.mxu0 %v351
        %416 = vmatmul.bf16.gmra.mxu0 %v368
        %v417 = vpop.f32.mrf.mxu0
        %v418 = vadd.f32 %v323, %v417
        %v419 = vpop.f32.mrf.mxu0
        %v420 = vadd.f32 %v323, %v419
        %421 = vmatmul.bf16.gmra.mxu0 %v371
        %v422 = vpop.f32.mrf.mxu0
        %v423 = vadd.f32 %v323, %v422
        %v424 = vpop.f32.mrf.mxu0
        %v425 = vadd.f32 %v323, %v424
        %426 = vmatmul.bf16.gmra.mxu0 %v374
        %v427 = vpop.f32.mrf.mxu0
        %v428 = vadd.f32 %v323, %v427
        %v429 = vpop.f32.mrf.mxu0
        %v430 = vadd.f32 %v323, %v429
        %431 = vmatmul.bf16.gmra.mxu0 %v377
        %v432 = vpop.f32.mrf.mxu0
        %v433 = vadd.f32 %v323, %v432
        %v434 = vpop.f32.mrf.mxu0
        %v435 = vadd.f32 %v323, %v434
        %436 = vdwg.mxu0
        %v437 = vmax.f32 %v389, 0.0
        %v438 = vmax.f32 %v418, 0.0
        %v439 = vmax.f32 %v391, 0.0
        %v440 = vmax.f32 %v420, 0.0
        %v441 = vmax.f32 %v394, 0.0
        %v442 = vmax.f32 %v423, 0.0
        %v443 = vmax.f32 %v396, 0.0
        %v444 = vmax.f32 %v425, 0.0
        %v445 = vmax.f32 %v399, 0.0
        %v446 = vmax.f32 %v428, 0.0
        %v447 = vmax.f32 %v401, 0.0
        %v448 = vmax.f32 %v430, 0.0
        %v449 = vmax.f32 %v404, 0.0
        %v450 = vmax.f32 %v433, 0.0
        %v451 = vmax.f32 %v406, 0.0
        %v452 = vmax.f32 %v435, 0.0
        %v453 = vpack.c.bf16 %v439, %v437
        %v454 = vpack.c.bf16 %v440, %v438
        %v455 = vpack.c.bf16 %v443, %v441
        %v456 = vpack.c.bf16 %v444, %v442
        %v457 = vpack.c.bf16 %v447, %v445
        %v458 = vpack.c.bf16 %v448, %v446
        %v459 = vpack.c.bf16 %v451, %v449
        %v460 = vpack.c.bf16 %v452, %v450
        %v461 = vld [vmem:[%s3] sm:$0xf]
        %v462 = vld [vmem:[%s3 + $0x4] sm:$0xf]
        %v463 = vld [vmem:[%s3 + $0x8] sm:$0xf]
        %v464 = vld [vmem:[%s3 + $0xc] sm:$0xf]
        %v465 = vld [vmem:[%s3 + $0x10] sm:$0xf]
        %v466 = vld [vmem:[%s3 + $0x14] sm:$0xf]
        %v467 = vld [vmem:[%s3 + $0x18] sm:$0xf]
        %v468 = vld [vmem:[%s3 + $0x1c] sm:$0xf]
        %v469 = vld [vmem:[%s3 + $0x20] sm:$0xf]
        %v470 = vld [vmem:[%s3 + $0x24] sm:$0xf]
        %v471 = vld [vmem:[%s3 + $0x28] sm:$0xf]
        %v472 = vld [vmem:[%s3 + $0x2c] sm:$0xf]
        %v473 = vld [vmem:[%s3 + $0x30] sm:$0xf]
        %v474 = vld [vmem:[%s3 + $0x34] sm:$0xf]
        %v475 = vld [vmem:[%s3 + $0x38] sm:$0xf]
        %v476 = vld [vmem:[%s3 + $0x3c] sm:$0xf]
        %v477 = vld [vmem:[%s3 + $0x40] sm:$0xf]
        %v478 = vld [vmem:[%s3 + $0x44] sm:$0xf]
        %v479 = vld [vmem:[%s3 + $0x48] sm:$0xf]
        %v480 = vld [vmem:[%s3 + $0x4c] sm:$0xf]
        %v481 = vld [vmem:[%s3 + $0x50] sm:$0xf]
        %v482 = vld [vmem:[%s3 + $0x54] sm:$0xf]
        %v483 = vld [vmem:[%s3 + $0x58] sm:$0xf]
        %v484 = vld [vmem:[%s3 + $0x5c] sm:$0xf]
        %v485 = vld [vmem:[%s3 + $0x60] sm:$0xf]
        %v486 = vld [vmem:[%s3 + $0x64] sm:$0xf]
        %v487 = vld [vmem:[%s3 + $0x68] sm:$0xf]
        %v488 = vld [vmem:[%s3 + $0x6c] sm:$0xf]
        %v489 = vld [vmem:[%s3 + $0x70] sm:$0xf]
        %v490 = vld [vmem:[%s3 + $0x74] sm:$0xf]
        %v491 = vld [vmem:[%s3 + $0x78] sm:$0xf]
        %v492 = vld [vmem:[%s3 + $0x7c] sm:$0xf]
        %v493 = vld [vmem:[%s4] sm:$0x1]
        %v495 = vperm.slane %v493, 0
        %v529 = vunpack.c.l.b16 %v461
        %v530 = vunpack.c.l.b16 %v462
        %v531 = vunpack.c.l.b16 %v463
        %v532 = vunpack.c.l.b16 %v464
        %v533 = vunpack.c.l.b16 %v465
        %v534 = vunpack.c.l.b16 %v466
        %v535 = vunpack.c.l.b16 %v467
        %v536 = vunpack.c.l.b16 %v468
        %v537 = vunpack.c.l.b16 %v469
        %v538 = vunpack.c.l.b16 %v470
        %v539 = vunpack.c.l.b16 %v471
        %v540 = vunpack.c.l.b16 %v472
        %v541 = vunpack.c.l.b16 %v473
        %v542 = vunpack.c.l.b16 %v474
        %v543 = vunpack.c.l.b16 %v475
        %v544 = vunpack.c.l.b16 %v476
        %v545 = vunpack.c.l.b16 %v477
        %v546 = vunpack.c.l.b16 %v478
        %v547 = vunpack.c.l.b16 %v479
        %v548 = vunpack.c.l.b16 %v480
        %v549 = vunpack.c.l.b16 %v481
        %v550 = vunpack.c.l.b16 %v482
        %v551 = vunpack.c.l.b16 %v483
        %v552 = vunpack.c.l.b16 %v484
        %v553 = vunpack.c.l.b16 %v485
        %v554 = vunpack.c.l.b16 %v486
        %v555 = vunpack.c.l.b16 %v487
        %v556 = vunpack.c.l.b16 %v488
        %v557 = vunpack.c.l.b16 %v489
        %v558 = vunpack.c.l.b16 %v490
        %v559 = vunpack.c.l.b16 %v491
        %v560 = vunpack.c.l.b16 %v492
        %v561 = vpack.c.b16 %v530, %v529
        %v562 = vpack.c.b16 %v532, %v531
        %v563 = vpack.c.b16 %v534, %v533
        %v564 = vpack.c.b16 %v536, %v535
        %v565 = vpack.c.b16 %v538, %v537
        %v566 = vpack.c.b16 %v540, %v539
        %v567 = vpack.c.b16 %v542, %v541
        %v568 = vpack.c.b16 %v544, %v543
        %v569 = vpack.c.b16 %v546, %v545
        %v570 = vpack.c.b16 %v548, %v547
        %v571 = vpack.c.b16 %v550, %v549
        %v572 = vpack.c.b16 %v552, %v551
        %v573 = vpack.c.b16 %v554, %v553
        %v574 = vpack.c.b16 %v556, %v555
        %v575 = vpack.c.b16 %v558, %v557
        %v576 = vpack.c.b16 %v560, %v559
        %593 = vmatpush.bf16.msra.mxu0 %v568
        %594 = vmatpush.bf16.msra.mxu0 %v567
        %595 = vmatpush.bf16.msra.mxu0 %v566
        %596 = vmatpush.bf16.msra.mxu0 %v565
        %597 = vmatpush.bf16.msra.mxu0 %v564
        %598 = vmatpush.bf16.msra.mxu0 %v563
        %599 = vmatpush.bf16.msra.mxu0 %v562
        %600 = vmatpush.bf16.msra.mxu0 %v561
        %601 = vmatmul.bf16.gmra.mxu0 %v453
        %v602 = vpop.f32.mrf.mxu0
        %v603 = vadd.f32 %v495, %v602
        %v604 = vpop.f32.mrf.mxu0
        %v605 = vadd.f32 %v495, %v604
        %606 = vmatmul.bf16.gmra.mxu0 %v455
        %v607 = vpop.f32.mrf.mxu0
        %v608 = vadd.f32 %v495, %v607
        %v609 = vpop.f32.mrf.mxu0
        %v610 = vadd.f32 %v495, %v609
        %611 = vmatmul.bf16.gmra.mxu0 %v457
        %v612 = vpop.f32.mrf.mxu0
        %v613 = vadd.f32 %v495, %v612
        %v614 = vpop.f32.mrf.mxu0
        %v615 = vadd.f32 %v495, %v614
        %616 = vmatmul.bf16.gmra.mxu0 %v459
        %v617 = vpop.f32.mrf.mxu0
        %v618 = vadd.f32 %v495, %v617
        %v619 = vpop.f32.mrf.mxu0
        %v620 = vadd.f32 %v495, %v619
        %621 = vdwg.mxu0
        %622 = vmatpush.bf16.msra.mxu0 %v576
        %623 = vmatpush.bf16.msra.mxu0 %v575
        %624 = vmatpush.bf16.msra.mxu0 %v574
        %625 = vmatpush.bf16.msra.mxu0 %v573
        %626 = vmatpush.bf16.msra.mxu0 %v572
        %627 = vmatpush.bf16.msra.mxu0 %v571
        %628 = vmatpush.bf16.msra.mxu0 %v570
        %629 = vmatpush.bf16.msra.mxu0 %v569
        %630 = vmatmul.bf16.gmra.mxu0 %v454
        %v631 = vpop.f32.mrf.mxu0
        %v632 = vadd.f32 %v603, %v631
        %v633 = vpop.f32.mrf.mxu0
        %v634 = vadd.f32 %v605, %v633
        %635 = vmatmul.bf16.gmra.mxu0 %v456
        %v636 = vpop.f32.mrf.mxu0
        %v637 = vadd.f32 %v608, %v636
        %v638 = vpop.f32.mrf.mxu0
        %v639 = vadd.f32 %v610, %v638
        %640 = vmatmul.bf16.gmra.mxu0 %v458
        %v641 = vpop.f32.mrf.mxu0
        %v642 = vadd.f32 %v613, %v641
        %v643 = vpop.f32.mrf.mxu0
        %v644 = vadd.f32 %v615, %v643
        %645 = vmatmul.bf16.gmra.mxu0 %v460
        %v646 = vpop.f32.mrf.mxu0
        %v647 = vadd.f32 %v618, %v646
        %v648 = vpop.f32.mrf.mxu0
        %v649 = vadd.f32 %v620, %v648
        %650 = vdwg.mxu0
        %v651 = vmax.f32 %v632, 0.0
        %v652 = vmax.f32 %v634, 0.0
        %v653 = vmax.f32 %v637, 0.0
        %v654 = vmax.f32 %v639, 0.0
        %v655 = vmax.f32 %v642, 0.0
        %v656 = vmax.f32 %v644, 0.0
        %v657 = vmax.f32 %v647, 0.0
        %v658 = vmax.f32 %v649, 0.0
        %v659 = vpack.c.bf16 %v652, %v651
        %v660 = vpack.c.bf16 %v654, %v653
        %v661 = vpack.c.bf16 %v656, %v655
        %v662 = vpack.c.bf16 %v658, %v657
        %v663 = vld [vmem:[#allocation2] sm:$0xf]
        %v664 = vld [vmem:[#allocation2 + $0x4] sm:$0xf]
        %v665 = vld [vmem:[#allocation2 + $0x8] sm:$0xf]
        %v666 = vld [vmem:[#allocation2 + $0xc] sm:$0xf]
        %v667 = vld [vmem:[#allocation2 + $0x10] sm:$0xf]
        %v668 = vld [vmem:[#allocation2 + $0x14] sm:$0xf]
        %v669 = vld [vmem:[#allocation2 + $0x18] sm:$0xf]
        %v670 = vld [vmem:[#allocation2 + $0x1c] sm:$0xf]
        %v671 = vld [vmem:[#allocation2 + $0x20] sm:$0xf]
        %v672 = vld [vmem:[#allocation2 + $0x24] sm:$0xf]
        %v673 = vld [vmem:[#allocation2 + $0x28] sm:$0xf]
        %v674 = vld [vmem:[#allocation2 + $0x2c] sm:$0xf]
        %v675 = vld [vmem:[#allocation2 + $0x30] sm:$0xf]
        %v676 = vld [vmem:[#allocation2 + $0x34] sm:$0xf]
        %v677 = vld [vmem:[#allocation2 + $0x38] sm:$0xf]
        %v678 = vld [vmem:[#allocation2 + $0x3c] sm:$0xf]
        %v679 = vld [vmem:[%s6] sm:$0x1]
        %v681 = vperm.slane %v679, 0
        %v699 = vunpack.c.l.b16 %v663
        %v700 = vunpack.c.l.b16 %v664
        %v701 = vunpack.c.l.b16 %v665
        %v702 = vunpack.c.l.b16 %v666
        %v703 = vunpack.c.l.b16 %v667
        %v704 = vunpack.c.l.b16 %v668
        %v705 = vunpack.c.l.b16 %v669
        %v706 = vunpack.c.l.b16 %v670
        %v707 = vunpack.c.l.b16 %v671
        %v708 = vunpack.c.l.b16 %v672
        %v709 = vunpack.c.l.b16 %v673
        %v710 = vunpack.c.l.b16 %v674
        %v711 = vunpack.c.l.b16 %v675
        %v712 = vunpack.c.l.b16 %v676
        %v713 = vunpack.c.l.b16 %v677
        %v714 = vunpack.c.l.b16 %v678
        %v715 = vpack.c.b16 %v700, %v699
        %v716 = vpack.c.b16 %v702, %v701
        %v717 = vpack.c.b16 %v704, %v703
        %v718 = vpack.c.b16 %v706, %v705
        %v719 = vpack.c.b16 %v708, %v707
        %v720 = vpack.c.b16 %v710, %v709
        %v721 = vpack.c.b16 %v712, %v711
        %v722 = vpack.c.b16 %v714, %v713
        %731 = vmatpush.bf16.msra.mxu0 %v722
        %732 = vmatpush.bf16.msra.mxu0 %v721
        %733 = vmatpush.bf16.msra.mxu0 %v720
        %734 = vmatpush.bf16.msra.mxu0 %v719
        %735 = vmatpush.bf16.msra.mxu0 %v718
        %736 = vmatpush.bf16.msra.mxu0 %v717
        %737 = vmatpush.bf16.msra.mxu0 %v716
        %738 = vmatpush.bf16.msra.mxu0 %v715
        %739 = vmatmul.bf16.gmra.mxu0 %v659
        %v740 = vpop.f32.mrf.mxu0
        %v741 = vadd.f32 %v681, %v740
        %v742 = vpop.f32.mrf.mxu0
        %v743 = vadd.f32 %v681, %v742
        %744 = vmatmul.bf16.gmra.mxu0 %v660
        %v745 = vpop.f32.mrf.mxu0
        %v746 = vadd.f32 %v681, %v745
        %v747 = vpop.f32.mrf.mxu0
        %v748 = vadd.f32 %v681, %v747
        %749 = vmatmul.bf16.gmra.mxu0 %v661
        %v750 = vpop.f32.mrf.mxu0
        %v751 = vadd.f32 %v681, %v750
        %v752 = vpop.f32.mrf.mxu0
        %v753 = vadd.f32 %v681, %v752
        %754 = vmatmul.bf16.gmra.mxu0 %v662
        %v755 = vpop.f32.mrf.mxu0
        %v756 = vadd.f32 %v681, %v755
        %v757 = vpop.f32.mrf.mxu0
        %v758 = vadd.f32 %v681, %v757
        %759 = vdwg.mxu0
        %760 = vst [vmem:[%s297] sm:$0xff] %v741
        %761 = vst [vmem:[%s297 + $0x8] sm:$0xff] %v743
        %762 = vst [vmem:[%s297 + $0x10] sm:$0xff] %v746
        %763 = vst [vmem:[%s297 + $0x18] sm:$0xff] %v748
        %764 = vst [vmem:[%s297 + $0x20] sm:$0xff] %v751
        %765 = vst [vmem:[%s297 + $0x28] sm:$0xff] %v753
        %766 = vst [vmem:[%s297 + $0x30] sm:$0xff] %v756
        %767 = vst [vmem:[%s297 + $0x38] sm:$0xff] %v758
        %s768 = smul.u32 8, %s19
        %p769 = scmp.lt.s32.totalorder %s768, 15
        %s770 = scalar_select %p769, %s768, 15
        %s771 = smul.addr %s770, 8
        %s772 = scalar_lea.vmem %s7, %s771
        // Predicated region
        $region53: #{_forward_pallas.1} parent=47 // pred_check
          %p773 = pneg %p189
        $region54: #{_forward_pallas.1} parent=47 // pred_check_branch
          %775 = sbr.rel (%p773) target = $region56
        $region55: #{_forward_pallas.1} parent=47 // pred_region
          %s776 = smul.u32 8, %s19
        $region56: #{_forward_pallas.1} parent=47 // pred_fallthru
          _
      $region48: #{_forward_pallas.1} parent=5 // pred_fallthru
        _
      %p777 = scmp.le.s32.totalorder 2, %s14
      // Predicated region
      $region57: #{_forward_pallas.1} parent=5 // pred_check
        %p778 = pneg %p777
      $region58: #{_forward_pallas.1} parent=5 // pred_check_branch
        %780 = sbr.rel (%p778) target = $region60
      $region59: #{_forward_pallas.1} parent=5 // pred_region
        %s781 = ssub.s32 %s14, 2
        // Predicated region
        $region61: #{_forward_pallas.1} parent=59 // pred_check
          %p782 = pneg %p195
        $region62: #{_forward_pallas.1} parent=59 // pred_check_branch
          %784 = sbr.rel (%p782) target = $region64
        $region63: #{_forward_pallas.1} parent=59 // pred_region
          %s785 = smul.u32 8, %s20
          %p786 = scmp.lt.s32.totalorder %s785, 15
          %s787 = scalar_select %p786, %s785, 15
          %s788 = smul.addr %s787, 8
          %s789 = scalar_lea.vmem %s7, %s788
        $region64: #{_forward_pallas.1} parent=59 // pred_fallthru
          _
      $region60: #{_forward_pallas.1} parent=5 // pred_fallthru
        _
    $region6: #{_forward_pallas.1} parent=1 // loop_footer
      %s18 = sadd.s32 1, %s14
    $region7: #{_forward_pallas.1} parent=1 // loop_footer_branch
      %13 = sbr.rel target = $region3
    $region8: #{_forward_pallas.1} parent=1 // loop_exit
      _
    %790 = vsyncpa [#allocation3], 1
    %s791 = scalar_lea.sflag [#allocation3], 1
    %792 = vsyncpa %s791, 1

// kernel: _forward_pallas.1
$region0: #{_forward_pallas.1}
  #allocation0 [shape = 'u32[]', space=smem, size = 0x4, offset = 0x4, fixed_abs, tag = 'smem constant byte address 0x4 - core index']
  #allocation1 [shape = 'u32[72,128]{1,0:T(1,128)}', space=vmem, size = 0x9000, scoped, tag = 'internal scratch']
  %s0 = inlined_call_operand.vmem [shape: f32[128,64], index: 0, kind: input, shape index: {}]
  %s1 = inlined_call_operand.vmem [shape: bf16[64,256], index: 1, kind: input, shape index: {}]
  %s2 = inlined_call_operand.vmem [shape: f32[1,256], index: 2, kind: input, shape index: {}]
  %s3 = inlined_call_operand.vmem [shape: bf16[256,128], index: 3, kind: input, shape index: {}]
  %s4 = inlined_call_operand.vmem [shape: f32[1,128], index: 4, kind: input, shape index: {}]
  %s5 = inlined_call_operand.hbm [shape: bf16[128,128], index: 5, kind: input, shape index: {}]
  %s6 = inlined_call_operand.vmem [shape: f32[1,128], index: 6, kind: input, shape index: {}]
  %s7 = inlined_call_operand.vmem [shape: f32[128,128], index: 7, kind: output, shape index: {}]
  %s8 = sld [smem:[#allocation0]]
  $region65: #{_forward_pallas.1} parent=0
    _
  %s10 = ssub.s32 1, %s8
  %s11 = scalar_select 0, %s10, %s8
  $region1: #{_forward_pallas.1} parent=0
    #allocation2 [shape = 'u8[32768]{0}', space=vmem, size = 0x8000, scoped, tag = 'input window, operand 5, single buffered']
    #allocation3 [shape = 's32[2]{0}', space=sflag, size = 0x8, scoped, tag = 'scoped memory for _forward_pallas.1']
    %12 = vsyncpa [#allocation3], 0
    loop: start=0, step=1, limit=4
    $region2: #{_forward_pallas.1} parent=1 // loop_pre_header
      _
    $region3: #{_forward_pallas.1} parent=1 // loop_header
      %s14 = sphi 0, %s18
      %p15 = scmp.ge.s32.totalorder %s14, 4
      %s24 = sphi 0, %s26
      %s27 = sphi 0, %s24
      %s28 = sphi 0, %s27
      %s44 = sphi 0, %s28
      %s48 = sphi 0, %s48
      %s50 = sphi 0, %s48
      %s51 = sphi 0, %s50
      %s65 = sphi 0, %s51
      %s69 = sphi 0, %s69
      %s71 = sphi 0, %s69
      %s72 = sphi 0, %s71
      %s86 = sphi 0, %s72
      %s90 = sphi 0, %s90
      %s92 = sphi 0, %s90
      %s93 = sphi 0, %s92
      %s107 = sphi 0, %s93
      %s111 = sphi 0, %s111
      %s113 = sphi 0, %s111
      %s114 = sphi 0, %s113
      %s128 = sphi 0, %s114
      %s132 = sphi 0, %s132
      %s134 = sphi 0, %s132
      %s135 = sphi 0, %s134
      %s149 = sphi 0, %s135
      %s153 = sphi 0, %s153
      %s155 = sphi 0, %s153
      %s156 = sphi 0, %s155
      %s170 = sphi 0, %s156
      %s176 = sphi 0, %s178
      %s179 = sphi 0, %s176
      %s180 = sphi 0, %s179
      %s196 = sphi 0, %s180
    $region4: #{_forward_pallas.1} parent=1 // loop_header_branch
      %17 = sbr.rel (%p15) target = $region8
    $region5: #{_forward_pallas.1} parent=1 // loop_body
      %s19 = ssub.s32 %s14, 1
      %s20 = ssub.s32 %s14, 2
      %s21 = sadd.s32 %s14, 1
      %s22 = ssub.s32 %s14, %s21
      %p23 = scmp.eq.s32.totalorder %s22, 0
      %s25 = sadd.s32 %s24, 1
      %s26 = scalar_select %p23, %s24, %s25
      %p29 = pneg %p23
      %p30 = scmp.eq.s32.totalorder %s14, 1
      %p31 = por %p29, %p30
      %p32 = scmp.ne.s32.totalorder %s24, %s27
      %p33 = scmp.eq.s32.totalorder %s14, 0
      %p34 = por %p32, %p33
      %p35 = scmp.ne.s32.totalorder %s24, %s27
      %p36 = scmp.eq.s32.totalorder %s19, 1
      %p37 = por %p35, %p36
      %p38 = scmp.ne.s32.totalorder %s27, %s28
      %p39 = scmp.eq.s32.totalorder %s19, 0
      %p40 = por %p38, %p39
      %p41 = scmp.ne.s32.totalorder %s27, %s28
      %p42 = scmp.eq.s32.totalorder %s20, 1
      %p43 = por %p41, %p42
      %p45 = scmp.ne.s32.totalorder %s28, %s44
      %p46 = scmp.eq.s32.totalorder %s20, 0
      %p47 = por %p45, %p46
      %s49 = sadd.s32 %s48, 1
      %p52 = scmp.eq.s32.totalorder %s14, 1
      %p53 = scmp.ne.s32.totalorder %s48, %s50
      %p54 = scmp.eq.s32.totalorder %s14, 0
      %p55 = por %p53, %p54
      %p56 = scmp.ne.s32.totalorder %s48, %s50
      %p57 = scmp.eq.s32.totalorder %s19, 1
      %p58 = por %p56, %p57
      %p59 = scmp.ne.s32.totalorder %s50, %s51
      %p60 = scmp.eq.s32.totalorder %s19, 0
      %p61 = por %p59, %p60
      %p62 = scmp.ne.s32.totalorder %s50, %s51
      %p63 = scmp.eq.s32.totalorder %s20, 1
      %p64 = por %p62, %p63
      %p66 = scmp.ne.s32.totalorder %s51, %s65
      %p67 = scmp.eq.s32.totalorder %s20, 0
      %p68 = por %p66, %p67
      %s70 = sadd.s32 %s69, 1
      %p73 = scmp.eq.s32.totalorder %s14, 1
      %p74 = scmp.ne.s32.totalorder %s69, %s71
      %p75 = scmp.eq.s32.totalorder %s14, 0
      %p76 = por %p74, %p75
      %p77 = scmp.ne.s32.totalorder %s69, %s71
      %p78 = scmp.eq.s32.totalorder %s19, 1
      %p79 = por %p77, %p78
      %p80 = scmp.ne.s32.totalorder %s71, %s72
      %p81 = scmp.eq.s32.totalorder %s19, 0
      %p82 = por %p80, %p81
      %p83 = scmp.ne.s32.totalorder %s71, %s72
      %p84 = scmp.eq.s32.totalorder %s20, 1
      %p85 = por %p83, %p84
      %p87 = scmp.ne.s32.totalorder %s72, %s86
      %p88 = scmp.eq.s32.totalorder %s20, 0
      %p89 = por %p87, %p88
      %s91 = sadd.s32 %s90, 1
      %p94 = scmp.eq.s32.totalorder %s14, 1
      %p95 = scmp.ne.s32.totalorder %s90, %s92
      %p96 = scmp.eq.s32.totalorder %s14, 0
      %p97 = por %p95, %p96
      %p98 = scmp.ne.s32.totalorder %s90, %s92
      %p99 = scmp.eq.s32.totalorder %s19, 1
      %p100 = por %p98, %p99
      %p101 = scmp.ne.s32.totalorder %s92, %s93
      %p102 = scmp.eq.s32.totalorder %s19, 0
      %p103 = por %p101, %p102
      %p104 = scmp.ne.s32.totalorder %s92, %s93
      %p105 = scmp.eq.s32.totalorder %s20, 1
      %p106 = por %p104, %p105
      %p108 = scmp.ne.s32.totalorder %s93, %s107
      %p109 = scmp.eq.s32.totalorder %s20, 0
      %p110 = por %p108, %p109
      %s112 = sadd.s32 %s111, 1
      %p115 = scmp.eq.s32.totalorder %s14, 1
      %p116 = scmp.ne.s32.totalorder %s111, %s113
      %p117 = scmp.eq.s32.totalorder %s14, 0
      %p118 = por %p116, %p117
      %p119 = scmp.ne.s32.totalorder %s111, %s113
      %p120 = scmp.eq.s32.totalorder %s19, 1
      %p121 = por %p119, %p120
      %p122 = scmp.ne.s32.totalorder %s113, %s114
      %p123 = scmp.eq.s32.totalorder %s19, 0
      %p124 = por %p122, %p123
      %p125 = scmp.ne.s32.totalorder %s113, %s114
      %p126 = scmp.eq.s32.totalorder %s20, 1
      %p127 = por %p125, %p126
      %p129 = scmp.ne.s32.totalorder %s114, %s128
      %p130 = scmp.eq.s32.totalorder %s20, 0
      %p131 = por %p129, %p130
      %s133 = sadd.s32 %s132, 1
      %p136 = scmp.eq.s32.totalorder %s14, 1
      %p137 = scmp.ne.s32.totalorder %s132, %s134
      %p138 = scmp.eq.s32.totalorder %s14, 0
      %p139 = por %p137, %p138
      %p140 = scmp.ne.s32.totalorder %s132, %s134
      %p141 = scmp.eq.s32.totalorder %s19, 1
      %p142 = por %p140, %p141
      %p143 = scmp.ne.s32.totalorder %s134, %s135
      %p144 = scmp.eq.s32.totalorder %s19, 0
      %p145 = por %p143, %p144
      %p146 = scmp.ne.s32.totalorder %s134, %s135
      %p147 = scmp.eq.s32.totalorder %s20, 1
      %p148 = por %p146, %p147
      %p150 = scmp.ne.s32.totalorder %s135, %s149
      %p151 = scmp.eq.s32.totalorder %s20, 0
      %p152 = por %p150, %p151
      %s154 = sadd.s32 %s153, 1
      %p157 = scmp.eq.s32.totalorder %s14, 1
      %p158 = scmp.ne.s32.totalorder %s153, %s155
      %p159 = scmp.eq.s32.totalorder %s14, 0
      %p160 = por %p158, %p159
      %p161 = scmp.ne.s32.totalorder %s153, %s155
      %p162 = scmp.eq.s32.totalorder %s19, 1
      %p163 = por %p161, %p162
      %p164 = scmp.ne.s32.totalorder %s155, %s156
      %p165 = scmp.eq.s32.totalorder %s19, 0
      %p166 = por %p164, %p165
      %p167 = scmp.ne.s32.totalorder %s155, %s156
      %p168 = scmp.eq.s32.totalorder %s20, 1
      %p169 = por %p167, %p168
      %p171 = scmp.ne.s32.totalorder %s156, %s170
      %p172 = scmp.eq.s32.totalorder %s20, 0
      %p173 = por %p171, %p172
      %s174 = ssub.s32 %s14, %s21
      %p175 = scmp.eq.s32.totalorder %s174, 0
      %s177 = sadd.s32 %s176, 1
      %s178 = scalar_select %p175, %s176, %s177
      %p181 = pneg %p175
      %p182 = scmp.eq.s32.totalorder %s14, 1
      %p183 = por %p181, %p182
      %p184 = scmp.ne.s32.totalorder %s176, %s179
      %p185 = scmp.eq.s32.totalorder %s14, 0
      %p186 = por %p184, %p185
      %p187 = scmp.ne.s32.totalorder %s176, %s179
      %p188 = scmp.eq.s32.totalorder %s19, 1
      %p189 = por %p187, %p188
      %p190 = scmp.ne.s32.totalorder %s179, %s180
      %p191 = scmp.eq.s32.totalorder %s19, 0
      %p192 = por %p190, %p191
      %p193 = scmp.ne.s32.totalorder %s179, %s180
      %p194 = scmp.eq.s32.totalorder %s20, 1
      %p195 = por %p193, %p194
      %p197 = scmp.ne.s32.totalorder %s180, %s196
      %p198 = scmp.eq.s32.totalorder %s20, 0
      %p199 = por %p197, %p198
      %p200 = scmp.le.s32.totalorder 1, %s14
      %p201 = scmp.lt.s32.totalorder %s14, 3
      %p202 = pnand %p200, %p201
      %p203 = pneg %p202
      // Predicated region
      $region9: #{_forward_pallas.1} parent=5 // pred_check
        _
      $region10: #{_forward_pallas.1} parent=5 // pred_check_branch
        %205 = sbr.rel (%p202) target = $region12
      $region11: #{_forward_pallas.1} parent=5 // pred_region
        %s206 = ssub.s32 %s14, 1
        // Predicated region
        $region13: #{_forward_pallas.1} parent=11 // pred_check
          %p207 = pneg %p61
        $region14: #{_forward_pallas.1} parent=11 // pred_check_branch
          %209 = sbr.rel (%p207) target = $region16
        $region15: #{_forward_pallas.1} parent=11 // pred_region
          _
        $region16: #{_forward_pallas.1} parent=11 // pred_fallthru
          _
        // Predicated region
        $region17: #{_forward_pallas.1} parent=11 // pred_check
          %p210 = pneg %p82
        $region18: #{_forward_pallas.1} parent=11 // pred_check_branch
          %212 = sbr.rel (%p210) target = $region20
        $region19: #{_forward_pallas.1} parent=11 // pred_region
          _
        $region20: #{_forward_pallas.1} parent=11 // pred_fallthru
          _
        // Predicated region
        $region21: #{_forward_pallas.1} parent=11 // pred_check
          %p213 = pneg %p103
        $region22: #{_forward_pallas.1} parent=11 // pred_check_branch
          %215 = sbr.rel (%p213) target = $region24
        $region23: #{_forward_pallas.1} parent=11 // pred_region
          _
        $region24: #{_forward_pallas.1} parent=11 // pred_fallthru
          _
        // Predicated region
        $region25: #{_forward_pallas.1} parent=11 // pred_check
          %p216 = pneg %p124
        $region26: #{_forward_pallas.1} parent=11 // pred_check_branch
          %218 = sbr.rel (%p216) target = $region28
        $region27: #{_forward_pallas.1} parent=11 // pred_region
          _
        $region28: #{_forward_pallas.1} parent=11 // pred_fallthru
          _
        // Predicated region
        $region29: #{_forward_pallas.1} parent=11 // pred_check
          %p219 = pneg %p145
        $region30: #{_forward_pallas.1} parent=11 // pred_check_branch
          %221 = sbr.rel (%p219) target = $region32
        $region31: #{_forward_pallas.1} parent=11 // pred_region
          %223 = vsyncadd [#allocation3], 0
          %s224 = sshll.u32 %s5, 4
          %s225 = int_to_ptr.hbm [resolvable:$true] %s224
          %s226 = sshll.u32 [#allocation2], 4
          %s227 = int_to_ptr.vmem [resolvable:$true] %s226
          %232 = dma.hbm_to_vmem [thread:$0]  %s225, 1024, %s227, [#allocation3], 64, 64, 4
        $region32: #{_forward_pallas.1} parent=11 // pred_fallthru
          _
        // Predicated region
        $region33: #{_forward_pallas.1} parent=11 // pred_check
          %p233 = pneg %p166
        $region34: #{_forward_pallas.1} parent=11 // pred_check_branch
          %235 = sbr.rel (%p233) target = $region36
        $region35: #{_forward_pallas.1} parent=11 // pred_region
          _
        $region36: #{_forward_pallas.1} parent=11 // pred_fallthru
          _
      $region12: #{_forward_pallas.1} parent=5 // pred_fallthru
        _
      %p236 = scmp.lt.s32.totalorder %s14, 2
      // Predicated region
      $region37: #{_forward_pallas.1} parent=5 // pred_check
        %p237 = pneg %p236
      $region38: #{_forward_pallas.1} parent=5 // pred_check_branch
        %239 = sbr.rel (%p237) target = $region40
      $region39: #{_forward_pallas.1} parent=5 // pred_region
        // Predicated region
        $region41: #{_forward_pallas.1} parent=39 // pred_check
          %p240 = pneg %p34
        $region42: #{_forward_pallas.1} parent=39 // pred_check_branch
          %242 = sbr.rel (%p240) target = $region44
        $region43: #{_forward_pallas.1} parent=39 // pred_region
          %s243 = smul.u32 8, %s14
          %p244 = scmp.lt.s32.totalorder %s243, 15
          %s245 = scalar_select %p244, %s243, 15
          %s246 = smul.addr %s245, 8
          %s247 = scalar_lea.vmem %s0, %s246
          %s248 = smul.u32 8, %s14
        $region44: #{_forward_pallas.1} parent=39 // pred_fallthru
          _
      $region40: #{_forward_pallas.1} parent=5 // pred_fallthru
        _
      %p249 = scmp.le.s32.totalorder 1, %s14
      %p250 = scmp.lt.s32.totalorder %s14, 3
      %p251 = pnand %p249, %p250
      %p252 = pneg %p251
      // Predicated region
      $region45: #{_forward_pallas.1} parent=5 // pred_check
        _
      $region46: #{_forward_pallas.1} parent=5 // pred_check_branch
        %254 = sbr.rel (%p251) target = $region48
      $region47: #{_forward_pallas.1} parent=5 // pred_region
        %s255 = ssub.s32 %s14, 1
        // Predicated region
        $region49: #{_forward_pallas.1} parent=47 // pred_check
          %p256 = pneg %p145
        $region50: #{_forward_pallas.1} parent=47 // pred_check_branch
          %258 = sbr.rel (%p256) target = $region52
        $region51: #{_forward_pallas.1} parent=47 // pred_region
          %260 = dma.done [#allocation3], 1024
        $region52: #{_forward_pallas.1} parent=47 // pred_fallthru
          _
        %s261 = smul.u32 8, %s19
        %p262 = scmp.lt.s32.totalorder %s261, 15
        %s263 = scalar_select %p262, %s261, 15
        %s264 = smul.addr %s263, 8
        %s265 = scalar_lea.vmem %s0, %s264
        %p266 = pneg %p40
        %p267 = pneg %p37
        %p268 = pneg %p61
        %p269 = pneg %p58
        %p270 = pneg %p82
        %p271 = pneg %p79
        %p272 = pneg %p103
        %p273 = pneg %p100
        %p274 = pneg %p124
        %p275 = pneg %p121
        %p276 = pneg %p145
        %p277 = pneg %p142
        %p278 = pneg %p166
        %p279 = pneg %p163
        %p280 = pneg %p192
        %p281 = pneg %p189
        %s282 = smul.u32 8, %s19
        %p283 = scmp.lt.s32.totalorder %s282, 15
        %s284 = scalar_select %p283, %s282, 15
        %s285 = smul.addr %s284, 8
        %s286 = scalar_lea.vmem %s7, %s285
        %s287 = smul.u32 8, %s19
        %p288 = scmp.lt.s32.totalorder %s287, 15
        %s289 = scalar_select %p288, %s287, 15
        %s290 = smul.addr %s289, 8
        %s291 = scalar_lea.vmem %s0, %s290
        %s292 = smul.u32 8, %s19
        %s293 = smul.u32 8, %s19
        %p294 = scmp.lt.s32.totalorder %s293, 15
        %s295 = scalar_select %p294, %s293, 15
        %s296 = smul.addr %s295, 8
        %s297 = scalar_lea.vmem %s7, %s296
        %s298 = smul.u32 8, %s19
        %v300 = vld [vmem:[%s291] sm:$0xff]
        %v301 = vld [vmem:[%s291 + $0x8] sm:$0xff]
        %v302 = vld [vmem:[%s291 + $0x10] sm:$0xff]
        %v303 = vld [vmem:[%s291 + $0x18] sm:$0xff]
        %v304 = vld [vmem:[%s291 + $0x20] sm:$0xff]
        %v305 = vld [vmem:[%s291 + $0x28] sm:$0xff]
        %v306 = vld [vmem:[%s291 + $0x30] sm:$0xff]
        %v307 = vld [vmem:[%s291 + $0x38] sm:$0xff]
        %v308 = vpack.c.bf16 %v301, %v300
        %v309 = vpack.c.bf16 %v303, %v302
        %v310 = vpack.c.bf16 %v305, %v304
        %v311 = vpack.c.bf16 %v307, %v306
        %v312 = vld [vmem:[%s1] sm:$0xff]
        %v313 = vld [vmem:[%s1 + $0x8] sm:$0xff]
        %v314 = vld [vmem:[%s1 + $0x10] sm:$0xff]
        %v315 = vld [vmem:[%s1 + $0x18] sm:$0xff]
        %v316 = vld [vmem:[%s1 + $0x20] sm:$0xff]
        %v317 = vld [vmem:[%s1 + $0x28] sm:$0xff]
        %v318 = vld [vmem:[%s1 + $0x30] sm:$0xff]
        %v319 = vld [vmem:[%s1 + $0x38] sm:$0xff]
        %v320 = vld [vmem:[%s2] sm:$0x3]
        %v322 = vperm.slane %v320, 0
        %v323 = vperm.slane %v320, 1
        %v334 = vunpack.c.l.b16 %v312
        %v335 = vunpack.c.h.b16 %v312
        %v336 = vunpack.c.l.b16 %v313
        %v337 = vunpack.c.h.b16 %v313
        %v338 = vunpack.c.l.b16 %v314
        %v339 = vunpack.c.h.b16 %v314
        %v340 = vunpack.c.l.b16 %v315
        %v341 = vunpack.c.h.b16 %v315
        %v342 = vunpack.c.l.b16 %v316
        %v343 = vunpack.c.h.b16 %v316
        %v344 = vunpack.c.l.b16 %v317
        %v345 = vunpack.c.h.b16 %v317
        %v346 = vunpack.c.l.b16 %v318
        %v347 = vunpack.c.h.b16 %v318
        %v348 = vunpack.c.l.b16 %v319
        %v349 = vunpack.c.h.b16 %v319
        %v350 = vpack.c.b16 %v336, %v334
        %v351 = vpack.c.b16 %v337, %v335
        %v352 = vpack.c.b16 %v340, %v338
        %v353 = vpack.c.b16 %v341, %v339
        %v354 = vpack.c.b16 %v344, %v342
        %v355 = vpack.c.b16 %v345, %v343
        %v356 = vpack.c.b16 %v348, %v346
        %v357 = vpack.c.b16 %v349, %v347
        %vm366 = vcmask 523264
        %v368 = vsel %vm366, %v308, 0
        %v371 = vsel %vm366, %v309, 0
        %v374 = vsel %vm366, %v310, 0
        %v377 = vsel %vm366, %v311, 0
        %379 = vmatpush.bf16.msra.mxu0 0
        %380 = vmatpush.bf16.msra.mxu0 0
        %381 = vmatpush.bf16.msra.mxu0 0
        %382 = vmatpush.bf16.msra.mxu0 0
        %383 = vmatpush.bf16.msra.mxu0 %v356
        %384 = vmatpush.bf16.msra.mxu0 %v354
        %385 = vmatpush.bf16.msra.mxu0 %v352
        %386 = vmatpush.bf16.msra.mxu0 %v350
        %387 = vmatmul.bf16.gmra.mxu0 %v368
        %v388 = vpop.f32.mrf.mxu0
        %v389 = vadd.f32 %v322, %v388
        %v390 = vpop.f32.mrf.mxu0
        %v391 = vadd.f32 %v322, %v390
        %392 = vmatmul.bf16.gmra.mxu0 %v371
        %v393 = vpop.f32.mrf.mxu0
        %v394 = vadd.f32 %v322, %v393
        %v395 = vpop.f32.mrf.mxu0
        %v396 = vadd.f32 %v322, %v395
        %397 = vmatmul.bf16.gmra.mxu0 %v374
        %v398 = vpop.f32.mrf.mxu0
        %v399 = vadd.f32 %v322, %v398
        %v400 = vpop.f32.mrf.mxu0
        %v401 = vadd.f32 %v322, %v400
        %402 = vmatmul.bf16.gmra.mxu0 %v377
        %v403 = vpop.f32.mrf.mxu0
        %v404 = vadd.f32 %v322, %v403
        %v405 = vpop.f32.mrf.mxu0
        %v406 = vadd.f32 %v322, %v405
        %407 = vdwg.mxu0
        %408 = vmatpush.bf16.msra.mxu0 0
        %409 = vmatpush.bf16.msra.mxu0 0
        %410 = vmatpush.bf16.msra.mxu0 0
        %411 = vmatpush.bf16.msra.mxu0 0
        %412 = vmatpush.bf16.msra.mxu0 %v357
        %413 = vmatpush.bf16.msra.mxu0 %v355
        %414 = vmatpush.bf16.msra.mxu0 %v353
        %415 = vmatpush.bf16.msra.mxu0 %v351
        %416 = vmatmul.bf16.gmra.mxu0 %v368
        %v417 = vpop.f32.mrf.mxu0
        %v418 = vadd.f32 %v323, %v417
        %v419 = vpop.f32.mrf.mxu0
        %v420 = vadd.f32 %v323, %v419
        %421 = vmatmul.bf16.gmra.mxu0 %v371
        %v422 = vpop.f32.mrf.mxu0
        %v423 = vadd.f32 %v323, %v422
        %v424 = vpop.f32.mrf.mxu0
        %v425 = vadd.f32 %v323, %v424
        %426 = vmatmul.bf16.gmra.mxu0 %v374
        %v427 = vpop.f32.mrf.mxu0
        %v428 = vadd.f32 %v323, %v427
        %v429 = vpop.f32.mrf.mxu0
        %v430 = vadd.f32 %v323, %v429
        %431 = vmatmul.bf16.gmra.mxu0 %v377
        %v432 = vpop.f32.mrf.mxu0
        %v433 = vadd.f32 %v323, %v432
        %v434 = vpop.f32.mrf.mxu0
        %v435 = vadd.f32 %v323, %v434
        %436 = vdwg.mxu0
        %v437 = vmax.f32 %v389, 0.0
        %v438 = vmax.f32 %v418, 0.0
        %v439 = vmax.f32 %v391, 0.0
        %v440 = vmax.f32 %v420, 0.0
        %v441 = vmax.f32 %v394, 0.0
        %v442 = vmax.f32 %v423, 0.0
        %v443 = vmax.f32 %v396, 0.0
        %v444 = vmax.f32 %v425, 0.0
        %v445 = vmax.f32 %v399, 0.0
        %v446 = vmax.f32 %v428, 0.0
        %v447 = vmax.f32 %v401, 0.0
        %v448 = vmax.f32 %v430, 0.0
        %v449 = vmax.f32 %v404, 0.0
        %v450 = vmax.f32 %v433, 0.0
        %v451 = vmax.f32 %v406, 0.0
        %v452 = vmax.f32 %v435, 0.0
        %v453 = vpack.c.bf16 %v439, %v437
        %v454 = vpack.c.bf16 %v440, %v438
        %v455 = vpack.c.bf16 %v443, %v441
        %v456 = vpack.c.bf16 %v444, %v442
        %v457 = vpack.c.bf16 %v447, %v445
        %v458 = vpack.c.bf16 %v448, %v446
        %v459 = vpack.c.bf16 %v451, %v449
        %v460 = vpack.c.bf16 %v452, %v450
        %v461 = vld [vmem:[%s3] sm:$0xf]
        %v462 = vld [vmem:[%s3 + $0x4] sm:$0xf]
        %v463 = vld [vmem:[%s3 + $0x8] sm:$0xf]
        %v464 = vld [vmem:[%s3 + $0xc] sm:$0xf]
        %v465 = vld [vmem:[%s3 + $0x10] sm:$0xf]
        %v466 = vld [vmem:[%s3 + $0x14] sm:$0xf]
        %v467 = vld [vmem:[%s3 + $0x18] sm:$0xf]
        %v468 = vld [vmem:[%s3 + $0x1c] sm:$0xf]
        %v469 = vld [vmem:[%s3 + $0x20] sm:$0xf]
        %v470 = vld [vmem:[%s3 + $0x24] sm:$0xf]
        %v471 = vld [vmem:[%s3 + $0x28] sm:$0xf]
        %v472 = vld [vmem:[%s3 + $0x2c] sm:$0xf]
        %v473 = vld [vmem:[%s3 + $0x30] sm:$0xf]
        %v474 = vld [vmem:[%s3 + $0x34] sm:$0xf]
        %v475 = vld [vmem:[%s3 + $0x38] sm:$0xf]
        %v476 = vld [vmem:[%s3 + $0x3c] sm:$0xf]
        %v477 = vld [vmem:[%s3 + $0x40] sm:$0xf]
        %v478 = vld [vmem:[%s3 + $0x44] sm:$0xf]
        %v479 = vld [vmem:[%s3 + $0x48] sm:$0xf]
        %v480 = vld [vmem:[%s3 + $0x4c] sm:$0xf]
        %v481 = vld [vmem:[%s3 + $0x50] sm:$0xf]
        %v482 = vld [vmem:[%s3 + $0x54] sm:$0xf]
        %v483 = vld [vmem:[%s3 + $0x58] sm:$0xf]
        %v484 = vld [vmem:[%s3 + $0x5c] sm:$0xf]
        %v485 = vld [vmem:[%s3 + $0x60] sm:$0xf]
        %v486 = vld [vmem:[%s3 + $0x64] sm:$0xf]
        %v487 = vld [vmem:[%s3 + $0x68] sm:$0xf]
        %v488 = vld [vmem:[%s3 + $0x6c] sm:$0xf]
        %v489 = vld [vmem:[%s3 + $0x70] sm:$0xf]
        %v490 = vld [vmem:[%s3 + $0x74] sm:$0xf]
        %v491 = vld [vmem:[%s3 + $0x78] sm:$0xf]
        %v492 = vld [vmem:[%s3 + $0x7c] sm:$0xf]
        %v493 = vld [vmem:[%s4] sm:$0x1]
        %v495 = vperm.slane %v493, 0
        %v529 = vunpack.c.l.b16 %v461
        %v530 = vunpack.c.l.b16 %v462
        %v531 = vunpack.c.l.b16 %v463
        %v532 = vunpack.c.l.b16 %v464
        %v533 = vunpack.c.l.b16 %v465
        %v534 = vunpack.c.l.b16 %v466
        %v535 = vunpack.c.l.b16 %v467
        %v536 = vunpack.c.l.b16 %v468
        %v537 = vunpack.c.l.b16 %v469
        %v538 = vunpack.c.l.b16 %v470
        %v539 = vunpack.c.l.b16 %v471
        %v540 = vunpack.c.l.b16 %v472
        %v541 = vunpack.c.l.b16 %v473
        %v542 = vunpack.c.l.b16 %v474
        %v543 = vunpack.c.l.b16 %v475
        %v544 = vunpack.c.l.b16 %v476
        %v545 = vunpack.c.l.b16 %v477
        %v546 = vunpack.c.l.b16 %v478
        %v547 = vunpack.c.l.b16 %v479
        %v548 = vunpack.c.l.b16 %v480
        %v549 = vunpack.c.l.b16 %v481
        %v550 = vunpack.c.l.b16 %v482
        %v551 = vunpack.c.l.b16 %v483
        %v552 = vunpack.c.l.b16 %v484
        %v553 = vunpack.c.l.b16 %v485
        %v554 = vunpack.c.l.b16 %v486
        %v555 = vunpack.c.l.b16 %v487
        %v556 = vunpack.c.l.b16 %v488
        %v557 = vunpack.c.l.b16 %v489
        %v558 = vunpack.c.l.b16 %v490
        %v559 = vunpack.c.l.b16 %v491
        %v560 = vunpack.c.l.b16 %v492
        %v561 = vpack.c.b16 %v530, %v529
        %v562 = vpack.c.b16 %v532, %v531
        %v563 = vpack.c.b16 %v534, %v533
        %v564 = vpack.c.b16 %v536, %v535
        %v565 = vpack.c.b16 %v538, %v537
        %v566 = vpack.c.b16 %v540, %v539
        %v567 = vpack.c.b16 %v542, %v541
        %v568 = vpack.c.b16 %v544, %v543
        %v569 = vpack.c.b16 %v546, %v545
        %v570 = vpack.c.b16 %v548, %v547
        %v571 = vpack.c.b16 %v550, %v549
        %v572 = vpack.c.b16 %v552, %v551
        %v573 = vpack.c.b16 %v554, %v553
        %v574 = vpack.c.b16 %v556, %v555
        %v575 = vpack.c.b16 %v558, %v557
        %v576 = vpack.c.b16 %v560, %v559
        %593 = vmatpush.bf16.msra.mxu0 %v568
        %594 = vmatpush.bf16.msra.mxu0 %v567
        %595 = vmatpush.bf16.msra.mxu0 %v566
        %596 = vmatpush.bf16.msra.mxu0 %v565
        %597 = vmatpush.bf16.msra.mxu0 %v564
        %598 = vmatpush.bf16.msra.mxu0 %v563
        %599 = vmatpush.bf16.msra.mxu0 %v562
        %600 = vmatpush.bf16.msra.mxu0 %v561
        %601 = vmatmul.bf16.gmra.mxu0 %v453
        %v602 = vpop.f32.mrf.mxu0
        %v603 = vadd.f32 %v495, %v602
        %v604 = vpop.f32.mrf.mxu0
        %v605 = vadd.f32 %v495, %v604
        %606 = vmatmul.bf16.gmra.mxu0 %v455
        %v607 = vpop.f32.mrf.mxu0
        %v608 = vadd.f32 %v495, %v607
        %v609 = vpop.f32.mrf.mxu0
        %v610 = vadd.f32 %v495, %v609
        %611 = vmatmul.bf16.gmra.mxu0 %v457
        %v612 = vpop.f32.mrf.mxu0
        %v613 = vadd.f32 %v495, %v612
        %v614 = vpop.f32.mrf.mxu0
        %v615 = vadd.f32 %v495, %v614
        %616 = vmatmul.bf16.gmra.mxu0 %v459
        %v617 = vpop.f32.mrf.mxu0
        %v618 = vadd.f32 %v495, %v617
        %v619 = vpop.f32.mrf.mxu0
        %v620 = vadd.f32 %v495, %v619
        %621 = vdwg.mxu0
        %622 = vmatpush.bf16.msra.mxu0 %v576
        %623 = vmatpush.bf16.msra.mxu0 %v575
        %624 = vmatpush.bf16.msra.mxu0 %v574
        %625 = vmatpush.bf16.msra.mxu0 %v573
        %626 = vmatpush.bf16.msra.mxu0 %v572
        %627 = vmatpush.bf16.msra.mxu0 %v571
        %628 = vmatpush.bf16.msra.mxu0 %v570
        %629 = vmatpush.bf16.msra.mxu0 %v569
        %630 = vmatmul.bf16.gmra.mxu0 %v454
        %v631 = vpop.f32.mrf.mxu0
        %v632 = vadd.f32 %v603, %v631
        %v633 = vpop.f32.mrf.mxu0
        %v634 = vadd.f32 %v605, %v633
        %635 = vmatmul.bf16.gmra.mxu0 %v456
        %v636 = vpop.f32.mrf.mxu0
        %v637 = vadd.f32 %v608, %v636
        %v638 = vpop.f32.mrf.mxu0
        %v639 = vadd.f32 %v610, %v638
        %640 = vmatmul.bf16.gmra.mxu0 %v458
        %v641 = vpop.f32.mrf.mxu0
        %v642 = vadd.f32 %v613, %v641
        %v643 = vpop.f32.mrf.mxu0
        %v644 = vadd.f32 %v615, %v643
        %645 = vmatmul.bf16.gmra.mxu0 %v460
        %v646 = vpop.f32.mrf.mxu0
        %v647 = vadd.f32 %v618, %v646
        %v648 = vpop.f32.mrf.mxu0
        %v649 = vadd.f32 %v620, %v648
        %650 = vdwg.mxu0
        %v651 = vmax.f32 %v632, 0.0
        %v652 = vmax.f32 %v634, 0.0
        %v653 = vmax.f32 %v637, 0.0
        %v654 = vmax.f32 %v639, 0.0
        %v655 = vmax.f32 %v642, 0.0
        %v656 = vmax.f32 %v644, 0.0
        %v657 = vmax.f32 %v647, 0.0
        %v658 = vmax.f32 %v649, 0.0
        %v659 = vpack.c.bf16 %v652, %v651
        %v660 = vpack.c.bf16 %v654, %v653
        %v661 = vpack.c.bf16 %v656, %v655
        %v662 = vpack.c.bf16 %v658, %v657
        %v663 = vld [vmem:[#allocation2] sm:$0xf]
        %v664 = vld [vmem:[#allocation2 + $0x4] sm:$0xf]
        %v665 = vld [vmem:[#allocation2 + $0x8] sm:$0xf]
        %v666 = vld [vmem:[#allocation2 + $0xc] sm:$0xf]
        %v667 = vld [vmem:[#allocation2 + $0x10] sm:$0xf]
        %v668 = vld [vmem:[#allocation2 + $0x14] sm:$0xf]
        %v669 = vld [vmem:[#allocation2 + $0x18] sm:$0xf]
        %v670 = vld [vmem:[#allocation2 + $0x1c] sm:$0xf]
        %v671 = vld [vmem:[#allocation2 + $0x20] sm:$0xf]
        %v672 = vld [vmem:[#allocation2 + $0x24] sm:$0xf]
        %v673 = vld [vmem:[#allocation2 + $0x28] sm:$0xf]
        %v674 = vld [vmem:[#allocation2 + $0x2c] sm:$0xf]
        %v675 = vld [vmem:[#allocation2 + $0x30] sm:$0xf]
        %v676 = vld [vmem:[#allocation2 + $0x34] sm:$0xf]
        %v677 = vld [vmem:[#allocation2 + $0x38] sm:$0xf]
        %v678 = vld [vmem:[#allocation2 + $0x3c] sm:$0xf]
        %v679 = vld [vmem:[%s6] sm:$0x1]
        %v681 = vperm.slane %v679, 0
        %v699 = vunpack.c.l.b16 %v663
        %v700 = vunpack.c.l.b16 %v664
        %v701 = vunpack.c.l.b16 %v665
        %v702 = vunpack.c.l.b16 %v666
        %v703 = vunpack.c.l.b16 %v667
        %v704 = vunpack.c.l.b16 %v668
        %v705 = vunpack.c.l.b16 %v669
        %v706 = vunpack.c.l.b16 %v670
        %v707 = vunpack.c.l.b16 %v671
        %v708 = vunpack.c.l.b16 %v672
        %v709 = vunpack.c.l.b16 %v673
        %v710 = vunpack.c.l.b16 %v674
        %v711 = vunpack.c.l.b16 %v675
        %v712 = vunpack.c.l.b16 %v676
        %v713 = vunpack.c.l.b16 %v677
        %v714 = vunpack.c.l.b16 %v678
        %v715 = vpack.c.b16 %v700, %v699
        %v716 = vpack.c.b16 %v702, %v701
        %v717 = vpack.c.b16 %v704, %v703
        %v718 = vpack.c.b16 %v706, %v705
        %v719 = vpack.c.b16 %v708, %v707
        %v720 = vpack.c.b16 %v710, %v709
        %v721 = vpack.c.b16 %v712, %v711
        %v722 = vpack.c.b16 %v714, %v713
        %731 = vmatpush.bf16.msra.mxu0 %v722
        %732 = vmatpush.bf16.msra.mxu0 %v721
        %733 = vmatpush.bf16.msra.mxu0 %v720
        %734 = vmatpush.bf16.msra.mxu0 %v719
        %735 = vmatpush.bf16.msra.mxu0 %v718
        %736 = vmatpush.bf16.msra.mxu0 %v717
        %737 = vmatpush.bf16.msra.mxu0 %v716
        %738 = vmatpush.bf16.msra.mxu0 %v715
        %739 = vmatmul.bf16.gmra.mxu0 %v659
        %v740 = vpop.f32.mrf.mxu0
        %v741 = vadd.f32 %v681, %v740
        %v742 = vpop.f32.mrf.mxu0
        %v743 = vadd.f32 %v681, %v742
        %744 = vmatmul.bf16.gmra.mxu0 %v660
        %v745 = vpop.f32.mrf.mxu0
        %v746 = vadd.f32 %v681, %v745
        %v747 = vpop.f32.mrf.mxu0
        %v748 = vadd.f32 %v681, %v747
        %749 = vmatmul.bf16.gmra.mxu0 %v661
        %v750 = vpop.f32.mrf.mxu0
        %v751 = vadd.f32 %v681, %v750
        %v752 = vpop.f32.mrf.mxu0
        %v753 = vadd.f32 %v681, %v752
        %754 = vmatmul.bf16.gmra.mxu0 %v662
        %v755 = vpop.f32.mrf.mxu0
        %v756 = vadd.f32 %v681, %v755
        %v757 = vpop.f32.mrf.mxu0
        %v758 = vadd.f32 %v681, %v757
        %759 = vdwg.mxu0
        %760 = vst [vmem:[%s297] sm:$0xff] %v741
        %761 = vst [vmem:[%s297 + $0x8] sm:$0xff] %v743
        %762 = vst [vmem:[%s297 + $0x10] sm:$0xff] %v746
        %763 = vst [vmem:[%s297 + $0x18] sm:$0xff] %v748
        %764 = vst [vmem:[%s297 + $0x20] sm:$0xff] %v751
        %765 = vst [vmem:[%s297 + $0x28] sm:$0xff] %v753
        %766 = vst [vmem:[%s297 + $0x30] sm:$0xff] %v756
        %767 = vst [vmem:[%s297 + $0x38] sm:$0xff] %v758
        %s768 = smul.u32 8, %s19
        %p769 = scmp.lt.s32.totalorder %s768, 15
        %s770 = scalar_select %p769, %s768, 15
        %s771 = smul.addr %s770, 8
        %s772 = scalar_lea.vmem %s7, %s771
        // Predicated region
        $region53: #{_forward_pallas.1} parent=47 // pred_check
          %p773 = pneg %p189
        $region54: #{_forward_pallas.1} parent=47 // pred_check_branch
          %775 = sbr.rel (%p773) target = $region56
        $region55: #{_forward_pallas.1} parent=47 // pred_region
          %s776 = smul.u32 8, %s19
        $region56: #{_forward_pallas.1} parent=47 // pred_fallthru
          _
      $region48: #{_forward_pallas.1} parent=5 // pred_fallthru
        _
      %p777 = scmp.le.s32.totalorder 2, %s14
      // Predicated region
      $region57: #{_forward_pallas.1} parent=5 // pred_check
        %p778 = pneg %p777
      $region58: #{_forward_pallas.1} parent=5 // pred_check_branch
        %780 = sbr.rel (%p778) target = $region60
      $region59: #{_forward_pallas.1} parent=5 // pred_region
        %s781 = ssub.s32 %s14, 2
        // Predicated region
        $region61: #{_forward_pallas.1} parent=59 // pred_check
          %p782 = pneg %p195
        $region62: #{_forward_pallas.1} parent=59 // pred_check_branch
          %784 = sbr.rel (%p782) target = $region64
        $region63: #{_forward_pallas.1} parent=59 // pred_region
          %s785 = smul.u32 8, %s20
          %p786 = scmp.lt.s32.totalorder %s785, 15
          %s787 = scalar_select %p786, %s785, 15
          %s788 = smul.addr %s787, 8
          %s789 = scalar_lea.vmem %s7, %s788
        $region64: #{_forward_pallas.1} parent=59 // pred_fallthru
          _
      $region60: #{_forward_pallas.1} parent=5 // pred_fallthru
        _
    $region6: #{_forward_pallas.1} parent=1 // loop_footer
      %s18 = sadd.s32 1, %s14
    $region7: #{_forward_pallas.1} parent=1 // loop_footer_branch
      %13 = sbr.rel target = $region3
    $region8: #{_forward_pallas.1} parent=1 // loop_exit
      _
    %790 = vsyncpa [#allocation3], 1
    %s791 = scalar_lea.sflag [#allocation3], 1
    %792 = vsyncpa %s791, 1

</llo_original>
